<compile_context>
chip_gen: v6e
topology: v6e:2x2x1
jax: 0.10.0
libtpu: 0.0.40
codegen_flags: <defaults>
</compile_context>

<pallas_src>
import functools
import math

import jax
import jax.numpy as jnp
from jax.experimental import pallas as pl
from jax.experimental.pallas import tpu as pltpu

D_MODEL = 64
N_HEAD = 4
R_MLP = 4
HEAD_DIM = D_MODEL // N_HEAD
LN_EPS = 1e-5
_INV_SQRT2 = 1.0 / math.sqrt(2.0)

# Row indices of the packed bias/LayerNorm slab.
_LN1_W, _LN1_B, _LN2_W, _LN2_B, _B_IN, _B_OUT, _B1, _B2 = range(8)
_BIAS_W = R_MLP * D_MODEL          # 256 lanes (widest bias vector)


def _layer_norm(v, w, b):
    mu = jnp.mean(v, axis=-1, keepdims=True)
    var = jnp.mean((v - mu) ** 2, axis=-1, keepdims=True)
    return (v - mu) * jax.lax.rsqrt(var + LN_EPS) * w + b


def transformer_encoder_kernel(x_ref, wqkv_ref, wout_ref, w1_ref, w2_ref, bias_ref,
                               o_ref, *, BB, S):
    D = D_MODEL
    H = N_HEAD
    HD = HEAD_DIM
    ROWS = BB * S
    R2 = ROWS // 2
    f32 = jnp.float32
    bf16 = jnp.bfloat16

    # Merged rows: BB batch elements * S tokens per grid step.
    x = x_ref[...].reshape(ROWS, D).astype(f32)                       # (ROWS, D)

    # Parameters: weights are bf16 full-array views (no slicing); biases/LN are f32 rows.
    w_qkv = wqkv_ref[...]                                             # (D, 3D) bf16, Q pre-scaled
    w_out = wout_ref[...]                                             # (D, D)   bf16
    w1 = w1_ref[...]                                                  # (D, 4D)  bf16
    w2 = w2_ref[...]                                                  # (4D, D)  bf16

    ln1_w = bias_ref[_LN1_W:_LN1_W + 1, 0:D]
    ln1_b = bias_ref[_LN1_B:_LN1_B + 1, 0:D]
    ln2_w = bias_ref[_LN2_W:_LN2_W + 1, 0:D]
    ln2_b = bias_ref[_LN2_B:_LN2_B + 1, 0:D]
    b_in = bias_ref[_B_IN:_B_IN + 1, 0:3 * D]
    b_out = bias_ref[_B_OUT:_B_OUT + 1, 0:D]
    b1 = bias_ref[_B1:_B1 + 1, 0:R_MLP * D]
    b2 = bias_ref[_B2:_B2 + 1, 0:D]

    # ---- LN1 + multi-head self-attention (pre-norm residual) ----
    xn = _layer_norm(x, ln1_w, ln1_b)
    qkv = jnp.dot(xn.astype(bf16), w_qkv, preferred_element_type=f32) + b_in   # (ROWS, 3D)

    def split_heads(base):
        # (ROWS, D) slice of qkv -> (H*BB, S, HD), head-major along the leading axis.
        parts = [qkv[:, base + h * HD: base + (h + 1) * HD].reshape(BB, S, HD)
                 for h in range(H)]
        return jnp.concatenate(parts, axis=0)

    q = split_heads(0).astype(bf16)          # scale already folded into the weights
    k = split_heads(D).astype(bf16)
    v = split_heads(2 * D).astype(bf16)

    # One batched score/context matmul pair over the merged (H*BB) batch.
    s = jnp.einsum('bqd,bkd->bqk', q, k, preferred_element_type=f32)  # (H*BB, S, S)
    s = s - jnp.max(s, axis=-1, keepdims=True)
    p = jnp.exp(s)
    p = p * pl.reciprocal(jnp.sum(p, axis=-1, keepdims=True), approx=True)
    o = jnp.einsum('bqk,bkd->bqd', p.astype(bf16), v,
                   preferred_element_type=f32)                        # (H*BB, S, HD)

    attn = jnp.concatenate(
        [o[h * BB:(h + 1) * BB].reshape(ROWS, HD) for h in range(H)], axis=-1)  # (ROWS, D)
    attn = jnp.dot(attn.astype(bf16), w_out, preferred_element_type=f32) + b_out

    x2 = x + attn

    # ---- LN2 + MLP (Linear -> exact GELU -> Linear), second residual ----
    xn2 = _layer_norm(x2, ln2_w, ln2_b)
    h1 = jnp.dot(xn2.astype(bf16), w1, preferred_element_type=f32) + b1
    # Exact (erf) GELU in f32, matching the PyTorch default.
    # TODO(synk): optionally switch to bf16/tanh-approx GELU on v6e/v7x if tolerance allows.
    h1 = 0.5 * h1 * (1.0 + jax.lax.erf(h1 * _INV_SQRT2))
    y = x2 + jnp.dot(h1.astype(bf16), w2, preferred_element_type=f32) + b2      # (ROWS, D)

    # Lane-dense store: output row j of this block holds tokens j and R2+j (64 lanes each),
    # giving a 128-lane unmasked store. The wrapper unpacks.
    packed = jnp.concatenate([y[:R2, :], y[R2:, :]], axis=-1)                   # (R2, 2D)
    o_ref[...] = packed.astype(o_ref.dtype)


def pack_params(raw):
    """One-time transform of PyTorch-layout weights into kernel arrays (weights in bf16)."""
    f32 = jnp.float32
    bf16 = jnp.bfloat16
    D = D_MODEL
    scale = 1.0 / math.sqrt(HEAD_DIM)
    # Fold the attention scale into the Q part of the in-projection (weights + bias).
    col_scale = jnp.concatenate([jnp.full((D,), scale, f32), jnp.ones((2 * D,), f32)])
    w_qkv_t = (raw["w_in"].astype(f32).T * col_scale[None, :]).astype(bf16)      # (D, 3D)
    b_in = raw["b_in"].astype(f32) * col_scale

    w_out_t = raw["w_out"].astype(f32).T.astype(bf16)                            # (D, D)
    w1_t = raw["w1"].astype(f32).T.astype(bf16)                                  # (D, 4D)
    w2_t = raw["w2"].astype(f32).T.astype(bf16)                                  # (4D, D)

    def row(v):
        v = v.astype(f32)
        return jnp.pad(v, (0, _BIAS_W - v.shape[0])).reshape(1, _BIAS_W)

    bias_slab = jnp.concatenate(
        [row(raw["ln1_w"]), row(raw["ln1_b"]),
         row(raw["ln2_w"]), row(raw["ln2_b"]),
         row(b_in), row(raw["b_out"]),
         row(raw["b1"]), row(raw["b2"])], axis=0)                                # (8, 256) f32
    return {"w_qkv_t": w_qkv_t, "w_out_t": w_out_t, "w1_t": w1_t, "w2_t": w2_t,
            "bias_slab": bias_slab}


def transformer_encoder(x, params, *, block_rows=1024):
    """x: (B, S, D_MODEL) -> (B, S, D_MODEL)."""
    B, S, D = x.shape
    assert D == D_MODEL

    # Rows per grid step must be a multiple of 16 so the packed (R2, 128) output block is
    # (8,128)-aligned.  bb_unit is the smallest BB granule achieving that.
    bb_unit = 16 // math.gcd(16, S)
    BB = min(B, max(1, block_rows // S))
    BB = max(bb_unit, (BB // bb_unit) * bb_unit)
    # If the whole batch fits in one block, split into >=2 grid steps so a 2-TC chip
    # (v7x) has work for both cores; also keeps the per-block VMEM footprint modest.
    if BB >= B and B > bb_unit:
        BB = max(bb_unit, (((B + 1) // 2) // bb_unit) * bb_unit)
    nblk = pl.cdiv(B, BB)
    Bp = nblk * BB
    if Bp != B:
        x = jnp.concatenate([x, jnp.zeros((Bp - B, S, D), x.dtype)], axis=0)

    ROWS = BB * S
    R2 = ROWS // 2

    w_qkv_t = params["w_qkv_t"]
    w_out_t = params["w_out_t"]
    w1_t = params["w1_t"]
    w2_t = params["w2_t"]
    bias_slab = params["bias_slab"]

    kernel = functools.partial(transformer_encoder_kernel, BB=BB, S=S)
    # TODO(synk): for very long sequences a flash-style query-tiled inner loop would be
    # needed to bound the (N_HEAD*BB, S, S) score footprint (v7x: 64 MiB VMEM per TC).
    out_packed = pl.pallas_call(
        kernel,
        out_shape=jax.ShapeDtypeStruct((Bp * S // 2, 2 * D), x.dtype),
        grid=(nblk,),
        in_specs=[
            pl.BlockSpec((BB, S, D), lambda i: (i, 0, 0)),
            pl.BlockSpec(w_qkv_t.shape, lambda i: (0, 0)),
            pl.BlockSpec(w_out_t.shape, lambda i: (0, 0)),
            pl.BlockSpec(w1_t.shape, lambda i: (0, 0)),
            pl.BlockSpec(w2_t.shape, lambda i: (0, 0)),
            pl.BlockSpec(bias_slab.shape, lambda i: (0, 0)),
        ],
        out_specs=pl.BlockSpec((R2, 2 * D), lambda i: (i, 0)),
        compiler_params=pltpu.CompilerParams(
            dimension_semantics=("parallel",),
            vmem_limit_bytes=48 * 1024 * 1024,
        ),
    )(x, w_qkv_t, w_out_t, w1_t, w2_t, bias_slab)

    # Undo the per-block lane packing (cheap XLA layout plumbing, outside the kernel).
    out = out_packed.reshape(nblk, R2, 2 * D)
    out = jnp.concatenate([out[:, :, :D], out[:, :, D:]], axis=1)   # (nblk, ROWS, D)
    out = out.reshape(Bp, S, D)
    return out[:B]


def reference(x, raw):
    """Pure-JAX f32 reference mirroring the PyTorch module exactly (unpacked params)."""
    B, S, D = x.shape
    xn = _layer_norm(x, raw["ln1_w"], raw["ln1_b"])
    qkv = xn @ raw["w_in"].T + raw["b_in"]
    q, k, v = jnp.split(qkv, 3, axis=-1)
    q = q.reshape(B, S, N_HEAD, HEAD_DIM).transpose(0, 2, 1, 3)
    k = k.reshape(B, S, N_HEAD, HEAD_DIM).transpose(0, 2, 1, 3)
    v = v.reshape(B, S, N_HEAD, HEAD_DIM).transpose(0, 2, 1, 3)
    s = (q @ jnp.swapaxes(k, -1, -2)) / math.sqrt(HEAD_DIM)
    p = jax.nn.softmax(s, axis=-1)
    a = (p @ v).transpose(0, 2, 1, 3).reshape(B, S, D)
    a = a @ raw["w_out"].T + raw["b_out"]
    x2 = x + a
    xn2 = _layer_norm(x2, raw["ln2_w"], raw["ln2_b"])
    h1 = xn2 @ raw["w1"].T + raw["b1"]
    h1 = 0.5 * h1 * (1.0 + jax.lax.erf(h1 * _INV_SQRT2))
    return x2 + h1 @ raw["w2"].T + raw["b2"]


if __name__ == "__main__":
    key = jax.random.PRNGKey(0)
    B, S = 2, 8
    keys = jax.random.split(key, 9)

    def nrm(k, shape, scale=0.1):
        return (scale * jax.random.normal(k, shape)).astype(jnp.float32)

    x = nrm(keys[0], (B, S, D_MODEL), scale=1.0)

    # PyTorch-shaped parameters (deterministic synthetic init).
    raw = dict(
        w_in=nrm(keys[1], (3 * D_MODEL, D_MODEL)),     # mha.in_proj_weight
        b_in=nrm(keys[2], (3 * D_MODEL,)),             # mha.in_proj_bias
        w_out=nrm(keys[3], (D_MODEL, D_MODEL)),        # mha.out_proj.weight
        b_out=nrm(keys[4], (D_MODEL,)),                # mha.out_proj.bias
        w1=nrm(keys[5], (R_MLP * D_MODEL, D_MODEL)),   # mlp[0].weight
        b1=nrm(keys[6], (R_MLP * D_MODEL,)),           # mlp[0].bias
        w2=nrm(keys[7], (D_MODEL, R_MLP * D_MODEL)),   # mlp[2].weight
        b2=nrm(keys[8], (D_MODEL,)),                   # mlp[2].bias
        ln1_w=jnp.ones((D_MODEL,), jnp.float32),       # LayerNorm defaults
        ln1_b=jnp.zeros((D_MODEL,), jnp.float32),
        ln2_w=jnp.ones((D_MODEL,), jnp.float32),
        ln2_b=jnp.zeros((D_MODEL,), jnp.float32),
    )

    y = transformer_encoder(x, pack_params(raw))
    jax.block_until_ready(y)

    y_ref = reference(x, raw)
    assert y.shape == (B, S, D_MODEL)
    # Tolerance accounts for bf16 MXU operands (f32 accumulation) + approx softmax recip.
    assert jnp.allclose(y, y_ref, atol=2e-2, rtol=2e-2), "kernel/reference mismatch"

    print("KERNEL_OK")
</pallas_src>

<mosaic_0001>
module attributes {stable_mosaic.version = 11 : i64} {
  func.func @transformer_encoder_kernel(%arg0: i32, %arg1: memref<2x8x64xf32, #tpu.memory_space<vmem>>, %arg2: memref<64x192xbf16, #tpu.memory_space<vmem>>, %arg3: memref<64x64xbf16, #tpu.memory_space<vmem>>, %arg4: memref<64x256xbf16, #tpu.memory_space<vmem>>, %arg5: memref<256x64xbf16, #tpu.memory_space<vmem>>, %arg6: memref<8x256xf32, #tpu.memory_space<vmem>>, %arg7: memref<8x128xf32, #tpu.memory_space<vmem>>) attributes {dimension_semantics = [#tpu.dimension_semantics<parallel>], iteration_bounds = array<i64: 1>, scalar_prefetch = 0 : i64, scratch_operands = 0 : i64, tpu.core_type = #tpu.core_type<tc>, window_params = [{transform_indices = @transform_0, window_bounds = array<i64: 2, 8, 64>}, {pipeline_mode = #tpu.pipeline_mode<synchronous>, transform_indices = @transform_1, window_bounds = array<i64: 64, 192>}, {pipeline_mode = #tpu.pipeline_mode<synchronous>, transform_indices = @transform_2, window_bounds = array<i64: 64, 64>}, {pipeline_mode = #tpu.pipeline_mode<synchronous>, transform_indices = @transform_3, window_bounds = array<i64: 64, 256>}, {pipeline_mode = #tpu.pipeline_mode<synchronous>, transform_indices = @transform_4, window_bounds = array<i64: 256, 64>}, {pipeline_mode = #tpu.pipeline_mode<synchronous>, transform_indices = @transform_5, window_bounds = array<i64: 8, 256>}, {transform_indices = @transform_6, window_bounds = array<i64: 8, 128>}]} {
    %c0 = arith.constant 0 : index
    %c0_0 = arith.constant 0 : index
    %c0_1 = arith.constant 0 : index
    %0 = vector.load %arg1[%c0, %c0_0, %c0_1] : memref<2x8x64xf32, #tpu.memory_space<vmem>>, vector<2x8x64xf32>
    %1 = vector.shape_cast %0 : vector<2x8x64xf32> to vector<16x64xf32>
    %c0_2 = arith.constant 0 : index
    %c0_3 = arith.constant 0 : index
    %2 = vector.load %arg2[%c0_2, %c0_3] : memref<64x192xbf16, #tpu.memory_space<vmem>>, vector<64x192xbf16>
    %c0_4 = arith.constant 0 : index
    %c0_5 = arith.constant 0 : index
    %3 = vector.load %arg3[%c0_4, %c0_5] : memref<64x64xbf16, #tpu.memory_space<vmem>>, vector<64x64xbf16>
    %c0_6 = arith.constant 0 : index
    %c0_7 = arith.constant 0 : index
    %4 = vector.load %arg4[%c0_6, %c0_7] : memref<64x256xbf16, #tpu.memory_space<vmem>>, vector<64x256xbf16>
    %c0_8 = arith.constant 0 : index
    %c0_9 = arith.constant 0 : index
    %5 = vector.load %arg5[%c0_8, %c0_9] : memref<256x64xbf16, #tpu.memory_space<vmem>>, vector<256x64xbf16>
    %c0_10 = arith.constant 0 : index
    %c0_11 = arith.constant 0 : index
    %6 = vector.load %arg6[%c0_10, %c0_11] : memref<8x256xf32, #tpu.memory_space<vmem>>, vector<1x64xf32>
    %c1 = arith.constant 1 : index
    %c0_12 = arith.constant 0 : index
    %7 = vector.load %arg6[%c1, %c0_12] : memref<8x256xf32, #tpu.memory_space<vmem>>, vector<1x64xf32>
    %c2 = arith.constant 2 : index
    %c0_13 = arith.constant 0 : index
    %8 = vector.load %arg6[%c2, %c0_13] : memref<8x256xf32, #tpu.memory_space<vmem>>, vector<1x64xf32>
    %c3 = arith.constant 3 : index
    %c0_14 = arith.constant 0 : index
    %9 = vector.load %arg6[%c3, %c0_14] : memref<8x256xf32, #tpu.memory_space<vmem>>, vector<1x64xf32>
    %c4 = arith.constant 4 : index
    %c0_15 = arith.constant 0 : index
    %10 = vector.load %arg6[%c4, %c0_15] : memref<8x256xf32, #tpu.memory_space<vmem>>, vector<1x192xf32>
    %c5 = arith.constant 5 : index
    %c0_16 = arith.constant 0 : index
    %11 = vector.load %arg6[%c5, %c0_16] : memref<8x256xf32, #tpu.memory_space<vmem>>, vector<1x64xf32>
    %c6 = arith.constant 6 : index
    %c0_17 = arith.constant 0 : index
    %12 = vector.load %arg6[%c6, %c0_17] : memref<8x256xf32, #tpu.memory_space<vmem>>, vector<1x256xf32>
    %c7 = arith.constant 7 : index
    %c0_18 = arith.constant 0 : index
    %13 = vector.load %arg6[%c7, %c0_18] : memref<8x256xf32, #tpu.memory_space<vmem>>, vector<1x64xf32>
    %cst = arith.constant dense<0.000000e+00> : vector<16xf32>
    %14 = vector.multi_reduction <add>, %1, %cst [1] : vector<16x64xf32> to vector<16xf32>
    %15 = vector.shape_cast %14 : vector<16xf32> to vector<16x1xf32>
    %cst_19 = arith.constant 6.400000e+01 : f32
    %16 = vector.broadcast %cst_19 : f32 to vector<16x1xf32>
    %17 = arith.divf %15, %16 : vector<16x1xf32>
    %18 = vector.broadcast %17 : vector<16x1xf32> to vector<16x64xf32>
    %19 = arith.subf %1, %18 : vector<16x64xf32>
    %20 = arith.mulf %19, %19 : vector<16x64xf32>
    %cst_20 = arith.constant dense<0.000000e+00> : vector<16xf32>
    %21 = vector.multi_reduction <add>, %20, %cst_20 [1] : vector<16x64xf32> to vector<16xf32>
    %22 = vector.shape_cast %21 : vector<16xf32> to vector<16x1xf32>
    %cst_21 = arith.constant 6.400000e+01 : f32
    %23 = vector.broadcast %cst_21 : f32 to vector<16x1xf32>
    %24 = arith.divf %22, %23 : vector<16x1xf32>
    %25 = vector.broadcast %17 : vector<16x1xf32> to vector<16x64xf32>
    %26 = arith.subf %1, %25 : vector<16x64xf32>
    %cst_22 = arith.constant 9.99999974E-6 : f32
    %27 = vector.broadcast %cst_22 : f32 to vector<16x1xf32>
    %28 = arith.addf %24, %27 : vector<16x1xf32>
    %29 = math.rsqrt %28 : vector<16x1xf32>
    %30 = vector.broadcast %29 : vector<16x1xf32> to vector<16x64xf32>
    %31 = arith.mulf %26, %30 : vector<16x64xf32>
    %32 = vector.broadcast %6 : vector<1x64xf32> to vector<16x64xf32>
    %33 = arith.mulf %31, %32 : vector<16x64xf32>
    %34 = vector.broadcast %7 : vector<1x64xf32> to vector<16x64xf32>
    %35 = arith.addf %33, %34 : vector<16x64xf32>
    %36 = arith.truncf %35 : vector<16x64xf32> to vector<16x64xbf16>
    %cst_23 = arith.constant dense<0.000000e+00> : vector<16x192xf32>
    %37 = tpu.matmul %36, %2, %cst_23 {dimension_numbers = #tpu.dot_dimension_numbers<[1], [0], [0], [1], [0, 0, 1, 1], [], []>} : vector<16x64xbf16>, vector<64x192xbf16>, vector<16x192xf32> -> vector<16x192xf32>
    %38 = vector.broadcast %10 : vector<1x192xf32> to vector<16x192xf32>
    %39 = arith.addf %37, %38 : vector<16x192xf32>
    %40 = vector.extract_strided_slice %39 {offsets = [0, 0], sizes = [16, 16], strides = [1, 1]} : vector<16x192xf32> to vector<16x16xf32>
    %41 = vector.shape_cast %40 : vector<16x16xf32> to vector<2x8x16xf32>
    %42 = vector.extract_strided_slice %39 {offsets = [0, 16], sizes = [16, 16], strides = [1, 1]} : vector<16x192xf32> to vector<16x16xf32>
    %43 = vector.shape_cast %42 : vector<16x16xf32> to vector<2x8x16xf32>
    %44 = vector.extract_strided_slice %39 {offsets = [0, 32], sizes = [16, 16], strides = [1, 1]} : vector<16x192xf32> to vector<16x16xf32>
    %45 = vector.shape_cast %44 : vector<16x16xf32> to vector<2x8x16xf32>
    %46 = vector.extract_strided_slice %39 {offsets = [0, 48], sizes = [16, 16], strides = [1, 1]} : vector<16x192xf32> to vector<16x16xf32>
    %47 = vector.shape_cast %46 : vector<16x16xf32> to vector<2x8x16xf32>
    %48 = tpu.concatenate %41, %43, %45, %47 in 0 : vector<2x8x16xf32>, vector<2x8x16xf32>, vector<2x8x16xf32>, vector<2x8x16xf32> -> vector<8x8x16xf32>
    %49 = arith.truncf %48 : vector<8x8x16xf32> to vector<8x8x16xbf16>
    %50 = vector.extract_strided_slice %39 {offsets = [0, 64], sizes = [16, 16], strides = [1, 1]} : vector<16x192xf32> to vector<16x16xf32>
    %51 = vector.shape_cast %50 : vector<16x16xf32> to vector<2x8x16xf32>
    %52 = vector.extract_strided_slice %39 {offsets = [0, 80], sizes = [16, 16], strides = [1, 1]} : vector<16x192xf32> to vector<16x16xf32>
    %53 = vector.shape_cast %52 : vector<16x16xf32> to vector<2x8x16xf32>
    %54 = vector.extract_strided_slice %39 {offsets = [0, 96], sizes = [16, 16], strides = [1, 1]} : vector<16x192xf32> to vector<16x16xf32>
    %55 = vector.shape_cast %54 : vector<16x16xf32> to vector<2x8x16xf32>
    %56 = vector.extract_strided_slice %39 {offsets = [0, 112], sizes = [16, 16], strides = [1, 1]} : vector<16x192xf32> to vector<16x16xf32>
    %57 = vector.shape_cast %56 : vector<16x16xf32> to vector<2x8x16xf32>
    %58 = tpu.concatenate %51, %53, %55, %57 in 0 : vector<2x8x16xf32>, vector<2x8x16xf32>, vector<2x8x16xf32>, vector<2x8x16xf32> -> vector<8x8x16xf32>
    %59 = arith.truncf %58 : vector<8x8x16xf32> to vector<8x8x16xbf16>
    %60 = vector.extract_strided_slice %39 {offsets = [0, 128], sizes = [16, 16], strides = [1, 1]} : vector<16x192xf32> to vector<16x16xf32>
    %61 = vector.shape_cast %60 : vector<16x16xf32> to vector<2x8x16xf32>
    %62 = vector.extract_strided_slice %39 {offsets = [0, 144], sizes = [16, 16], strides = [1, 1]} : vector<16x192xf32> to vector<16x16xf32>
    %63 = vector.shape_cast %62 : vector<16x16xf32> to vector<2x8x16xf32>
    %64 = vector.extract_strided_slice %39 {offsets = [0, 160], sizes = [16, 16], strides = [1, 1]} : vector<16x192xf32> to vector<16x16xf32>
    %65 = vector.shape_cast %64 : vector<16x16xf32> to vector<2x8x16xf32>
    %66 = vector.extract_strided_slice %39 {offsets = [0, 176], sizes = [16, 16], strides = [1, 1]} : vector<16x192xf32> to vector<16x16xf32>
    %67 = vector.shape_cast %66 : vector<16x16xf32> to vector<2x8x16xf32>
    %68 = tpu.concatenate %61, %63, %65, %67 in 0 : vector<2x8x16xf32>, vector<2x8x16xf32>, vector<2x8x16xf32>, vector<2x8x16xf32> -> vector<8x8x16xf32>
    %69 = arith.truncf %68 : vector<8x8x16xf32> to vector<8x8x16xbf16>
    "tpu.trace_start"() <{level = 10 : i32, message = "bqd,bkd->bqk"}> : () -> ()
    %cst_24 = arith.constant dense<0.000000e+00> : vector<8x8x8xf32>
    %70 = tpu.matmul %49, %59, %cst_24 {dimension_numbers = #tpu.dot_dimension_numbers<[2], [2], [1], [1], [0, 0, 0, 1, 1, 1], [0], [0]>} : vector<8x8x16xbf16>, vector<8x8x16xbf16>, vector<8x8x8xf32> -> vector<8x8x8xf32>
    "tpu.trace_stop"() : () -> ()
    %cst_25 = arith.constant dense<0xFF800000> : vector<8x8xf32>
    %71 = vector.multi_reduction <maximumf>, %70, %cst_25 [2] : vector<8x8x8xf32> to vector<8x8xf32>
    %72 = vector.shape_cast %71 : vector<8x8xf32> to vector<8x8x1xf32>
    %73 = vector.broadcast %72 : vector<8x8x1xf32> to vector<8x8x8xf32>
    %74 = arith.subf %70, %73 : vector<8x8x8xf32>
    %75 = math.exp %74 : vector<8x8x8xf32>
    %cst_26 = arith.constant dense<0.000000e+00> : vector<8x8xf32>
    %76 = vector.multi_reduction <add>, %75, %cst_26 [2] : vector<8x8x8xf32> to vector<8x8xf32>
    %77 = vector.shape_cast %76 : vector<8x8xf32> to vector<8x8x1xf32>
    %78 = tpu.reciprocal %77 {approx = true} : vector<8x8x1xf32> -> vector<8x8x1xf32>
    %79 = vector.broadcast %78 : vector<8x8x1xf32> to vector<8x8x8xf32>
    %80 = arith.mulf %75, %79 : vector<8x8x8xf32>
    %81 = arith.truncf %80 : vector<8x8x8xf32> to vector<8x8x8xbf16>
    "tpu.trace_start"() <{level = 10 : i32, message = "bqk,bkd->bqd"}> : () -> ()
    %cst_27 = arith.constant dense<0.000000e+00> : vector<8x8x16xf32>
    %82 = tpu.matmul %81, %69, %cst_27 {dimension_numbers = #tpu.dot_dimension_numbers<[2], [1], [1], [2], [0, 0, 0, 1, 1, 2], [0], [0]>} : vector<8x8x8xbf16>, vector<8x8x16xbf16>, vector<8x8x16xf32> -> vector<8x8x16xf32>
    "tpu.trace_stop"() : () -> ()
    %83 = vector.extract_strided_slice %82 {offsets = [0, 0, 0], sizes = [2, 8, 16], strides = [1, 1, 1]} : vector<8x8x16xf32> to vector<2x8x16xf32>
    %84 = vector.shape_cast %83 : vector<2x8x16xf32> to vector<16x16xf32>
    %85 = vector.extract_strided_slice %82 {offsets = [2, 0, 0], sizes = [2, 8, 16], strides = [1, 1, 1]} : vector<8x8x16xf32> to vector<2x8x16xf32>
    %86 = vector.shape_cast %85 : vector<2x8x16xf32> to vector<16x16xf32>
    %87 = vector.extract_strided_slice %82 {offsets = [4, 0, 0], sizes = [2, 8, 16], strides = [1, 1, 1]} : vector<8x8x16xf32> to vector<2x8x16xf32>
    %88 = vector.shape_cast %87 : vector<2x8x16xf32> to vector<16x16xf32>
    %89 = vector.extract_strided_slice %82 {offsets = [6, 0, 0], sizes = [2, 8, 16], strides = [1, 1, 1]} : vector<8x8x16xf32> to vector<2x8x16xf32>
    %90 = vector.shape_cast %89 : vector<2x8x16xf32> to vector<16x16xf32>
    %91 = tpu.concatenate %84, %86, %88, %90 in 1 : vector<16x16xf32>, vector<16x16xf32>, vector<16x16xf32>, vector<16x16xf32> -> vector<16x64xf32>
    %92 = arith.truncf %91 : vector<16x64xf32> to vector<16x64xbf16>
    %cst_28 = arith.constant dense<0.000000e+00> : vector<16x64xf32>
    %93 = tpu.matmul %92, %3, %cst_28 {dimension_numbers = #tpu.dot_dimension_numbers<[1], [0], [0], [1], [0, 0, 1, 1], [], []>} : vector<16x64xbf16>, vector<64x64xbf16>, vector<16x64xf32> -> vector<16x64xf32>
    %94 = vector.broadcast %11 : vector<1x64xf32> to vector<16x64xf32>
    %95 = arith.addf %93, %94 : vector<16x64xf32>
    %96 = arith.addf %1, %95 : vector<16x64xf32>
    %cst_29 = arith.constant dense<0.000000e+00> : vector<16xf32>
    %97 = vector.multi_reduction <add>, %96, %cst_29 [1] : vector<16x64xf32> to vector<16xf32>
    %98 = vector.shape_cast %97 : vector<16xf32> to vector<16x1xf32>
    %cst_30 = arith.constant 6.400000e+01 : f32
    %99 = vector.broadcast %cst_30 : f32 to vector<16x1xf32>
    %100 = arith.divf %98, %99 : vector<16x1xf32>
    %101 = vector.broadcast %100 : vector<16x1xf32> to vector<16x64xf32>
    %102 = arith.subf %96, %101 : vector<16x64xf32>
    %103 = arith.mulf %102, %102 : vector<16x64xf32>
    %cst_31 = arith.constant dense<0.000000e+00> : vector<16xf32>
    %104 = vector.multi_reduction <add>, %103, %cst_31 [1] : vector<16x64xf32> to vector<16xf32>
    %105 = vector.shape_cast %104 : vector<16xf32> to vector<16x1xf32>
    %cst_32 = arith.constant 6.400000e+01 : f32
    %106 = vector.broadcast %cst_32 : f32 to vector<16x1xf32>
    %107 = arith.divf %105, %106 : vector<16x1xf32>
    %108 = vector.broadcast %100 : vector<16x1xf32> to vector<16x64xf32>
    %109 = arith.subf %96, %108 : vector<16x64xf32>
    %cst_33 = arith.constant 9.99999974E-6 : f32
    %110 = vector.broadcast %cst_33 : f32 to vector<16x1xf32>
    %111 = arith.addf %107, %110 : vector<16x1xf32>
    %112 = math.rsqrt %111 : vector<16x1xf32>
    %113 = vector.broadcast %112 : vector<16x1xf32> to vector<16x64xf32>
    %114 = arith.mulf %109, %113 : vector<16x64xf32>
    %115 = vector.broadcast %8 : vector<1x64xf32> to vector<16x64xf32>
    %116 = arith.mulf %114, %115 : vector<16x64xf32>
    %117 = vector.broadcast %9 : vector<1x64xf32> to vector<16x64xf32>
    %118 = arith.addf %116, %117 : vector<16x64xf32>
    %119 = arith.truncf %118 : vector<16x64xf32> to vector<16x64xbf16>
    %cst_34 = arith.constant dense<0.000000e+00> : vector<16x256xf32>
    %120 = tpu.matmul %119, %4, %cst_34 {dimension_numbers = #tpu.dot_dimension_numbers<[1], [0], [0], [1], [0, 0, 1, 1], [], []>} : vector<16x64xbf16>, vector<64x256xbf16>, vector<16x256xf32> -> vector<16x256xf32>
    %121 = vector.broadcast %12 : vector<1x256xf32> to vector<16x256xf32>
    %122 = arith.addf %120, %121 : vector<16x256xf32>
    %cst_35 = arith.constant 5.000000e-01 : f32
    %123 = vector.broadcast %cst_35 : f32 to vector<16x256xf32>
    %124 = arith.mulf %123, %122 : vector<16x256xf32>
    %cst_36 = arith.constant 0.707106769 : f32
    %125 = vector.broadcast %cst_36 : f32 to vector<16x256xf32>
    %126 = arith.mulf %122, %125 : vector<16x256xf32>
    %127 = math.erf %126 : vector<16x256xf32>
    %cst_37 = arith.constant 1.000000e+00 : f32
    %128 = vector.broadcast %cst_37 : f32 to vector<16x256xf32>
    %129 = arith.addf %128, %127 : vector<16x256xf32>
    %130 = arith.mulf %124, %129 : vector<16x256xf32>
    %131 = arith.truncf %130 : vector<16x256xf32> to vector<16x256xbf16>
    %cst_38 = arith.constant dense<0.000000e+00> : vector<16x64xf32>
    %132 = tpu.matmul %131, %5, %cst_38 {dimension_numbers = #tpu.dot_dimension_numbers<[1], [0], [0], [1], [0, 0, 1, 1], [], []>} : vector<16x256xbf16>, vector<256x64xbf16>, vector<16x64xf32> -> vector<16x64xf32>
    %133 = arith.addf %96, %132 : vector<16x64xf32>
    %134 = vector.broadcast %13 : vector<1x64xf32> to vector<16x64xf32>
    %135 = arith.addf %133, %134 : vector<16x64xf32>
    %136 = vector.extract_strided_slice %135 {offsets = [0, 0], sizes = [8, 64], strides = [1, 1]} : vector<16x64xf32> to vector<8x64xf32>
    %137 = vector.extract_strided_slice %135 {offsets = [8, 0], sizes = [8, 64], strides = [1, 1]} : vector<16x64xf32> to vector<8x64xf32>
    %138 = tpu.concatenate %136, %137 in 1 : vector<8x64xf32>, vector<8x64xf32> -> vector<8x128xf32>
    %c0_39 = arith.constant 0 : index
    %c0_40 = arith.constant 0 : index
    %139 = vector.load %arg7[%c0_39, %c0_40] : memref<8x128xf32, #tpu.memory_space<vmem>>, vector<8x128xf32>
    tpu.vector_store %arg7[%c0_39, %c0_40], %138 {strides = array<i32>} : memref<8x128xf32, #tpu.memory_space<vmem>>, vector<8x128xf32>,
    return
  }
  func.func @transform_0(%arg0: i32) -> (i32, i32, i32) {
    %c0_i32 = arith.constant 0 : i32
    %c0_i32_0 = arith.constant 0 : i32
    %c0_i32_1 = arith.constant 0 : i32
    return %arg0, %c0_i32, %c0_i32_0 : i32, i32, i32
  }
  func.func @transform_1(%arg0: i32) -> (i32, i32) {
    %c0_i32 = arith.constant 0 : i32
    %c0_i32_0 = arith.constant 0 : i32
    %c0_i32_1 = arith.constant 0 : i32
    return %c0_i32, %c0_i32_0 : i32, i32
  }
  func.func @transform_2(%arg0: i32) -> (i32, i32) {
    %c0_i32 = arith.constant 0 : i32
    %c0_i32_0 = arith.constant 0 : i32
    %c0_i32_1 = arith.constant 0 : i32
    return %c0_i32, %c0_i32_0 : i32, i32
  }
  func.func @transform_3(%arg0: i32) -> (i32, i32) {
    %c0_i32 = arith.constant 0 : i32
    %c0_i32_0 = arith.constant 0 : i32
    %c0_i32_1 = arith.constant 0 : i32
    return %c0_i32, %c0_i32_0 : i32, i32
  }
  func.func @transform_4(%arg0: i32) -> (i32, i32) {
    %c0_i32 = arith.constant 0 : i32
    %c0_i32_0 = arith.constant 0 : i32
    %c0_i32_1 = arith.constant 0 : i32
    return %c0_i32, %c0_i32_0 : i32, i32
  }
  func.func @transform_5(%arg0: i32) -> (i32, i32) {
    %c0_i32 = arith.constant 0 : i32
    %c0_i32_0 = arith.constant 0 : i32
    %c0_i32_1 = arith.constant 0 : i32
    return %c0_i32, %c0_i32_0 : i32, i32
  }
  func.func @transform_6(%arg0: i32) -> (i32, i32) {
    %c0_i32 = arith.constant 0 : i32
    %c0_i32_0 = arith.constant 0 : i32
    return %arg0, %c0_i32 : i32, i32
  }
}

</mosaic_0001>

<llo_original>
// kernel: tpu_custom_call.1
$region0: #{tpu_custom_call.1}
  #allocation0 [shape = 'u32[]', space=smem, size = 0x4, offset = 0x4, fixed_abs, tag = 'smem constant byte address 0x4 - core index']
  #allocation1 [shape = 'u32[144,128]{1,0:T(1,128)}', space=vmem, size = 0x12000, scoped, tag = 'internal scratch']
  %s0 = inlined_call_operand.vmem [shape: f32[2,8,64], index: 0, kind: input, shape index: {}]
  %s1 = inlined_call_operand.vmem [shape: bf16[64,192], index: 1, kind: input, shape index: {}]
  %s2 = inlined_call_operand.vmem [shape: bf16[64,64], index: 2, kind: input, shape index: {}]
  %s3 = inlined_call_operand.vmem [shape: bf16[64,256], index: 3, kind: input, shape index: {}]
  %s4 = inlined_call_operand.vmem [shape: bf16[256,64], index: 4, kind: input, shape index: {}]
  %s5 = inlined_call_operand.vmem [shape: f32[8,256], index: 5, kind: input, shape index: {}]
  %s6 = inlined_call_operand.hbm [shape: f32[8,128], index: 6, kind: output, shape index: {}]
  %s7 = sld [smem:[#allocation0]]
  $region34: #{tpu_custom_call.1} parent=0
    _
  %s9 = ssub.s32 1, %s7
  %s10 = scalar_select 0, %s9, %s7
  $region1: #{tpu_custom_call.1} parent=0
    #allocation2 [shape = 'u8[4096]{0}', space=vmem, size = 0x1000, scoped, tag = 'output window, operand 0, single buffered']
    #allocation3 [shape = 's32[1]{0}', space=sflag, size = 0x4, scoped, tag = 'scoped memory for tpu_custom_call.1']
    %11 = vsyncpa [#allocation3], 0
    // Predicated region
    $region2: #{tpu_custom_call.1} parent=1 // pred_check
      _
    $region3: #{tpu_custom_call.1} parent=1 // pred_check_branch
      %13 = sbr.rel (0) target = $region5
    $region4: #{tpu_custom_call.1} parent=1 // pred_region
      _
    $region5: #{tpu_custom_call.1} parent=1 // pred_fallthru
      _
    // Predicated region
    $region6: #{tpu_custom_call.1} parent=1 // pred_check
      _
    $region7: #{tpu_custom_call.1} parent=1 // pred_check_branch
      %15 = sbr.rel (0) target = $region9
    $region8: #{tpu_custom_call.1} parent=1 // pred_region
      _
    $region9: #{tpu_custom_call.1} parent=1 // pred_fallthru
      _
    // Predicated region
    $region10: #{tpu_custom_call.1} parent=1 // pred_check
      _
    $region11: #{tpu_custom_call.1} parent=1 // pred_check_branch
      %17 = sbr.rel (0) target = $region13
    $region12: #{tpu_custom_call.1} parent=1 // pred_region
      _
    $region13: #{tpu_custom_call.1} parent=1 // pred_fallthru
      _
    // Predicated region
    $region14: #{tpu_custom_call.1} parent=1 // pred_check
      _
    $region15: #{tpu_custom_call.1} parent=1 // pred_check_branch
      %19 = sbr.rel (0) target = $region17
    $region16: #{tpu_custom_call.1} parent=1 // pred_region
      _
    $region17: #{tpu_custom_call.1} parent=1 // pred_fallthru
      _
    // Predicated region
    $region18: #{tpu_custom_call.1} parent=1 // pred_check
      _
    $region19: #{tpu_custom_call.1} parent=1 // pred_check_branch
      %21 = sbr.rel (0) target = $region21
    $region20: #{tpu_custom_call.1} parent=1 // pred_region
      _
    $region21: #{tpu_custom_call.1} parent=1 // pred_fallthru
      _
    // Predicated region
    $region22: #{tpu_custom_call.1} parent=1 // pred_check
      _
    $region23: #{tpu_custom_call.1} parent=1 // pred_check_branch
      %23 = sbr.rel (0) target = $region25
    $region24: #{tpu_custom_call.1} parent=1 // pred_region
      _
    $region25: #{tpu_custom_call.1} parent=1 // pred_fallthru
      _
    %v25 = vld [vmem:[%s0] sm:$0xff]
    %v26 = vld [vmem:[%s0 + $0x8] sm:$0xff]
    %v27 = vld [vmem:[%s1] sm:$0xff]
    %v28 = vld [vmem:[%s1 + $0x8] sm:$0xff]
    %v29 = vld [vmem:[%s1 + $0x10] sm:$0xff]
    %v30 = vld [vmem:[%s1 + $0x18] sm:$0xff]
    %v31 = vld [vmem:[%s1 + $0x20] sm:$0xff]
    %v32 = vld [vmem:[%s1 + $0x28] sm:$0xff]
    %v33 = vld [vmem:[%s1 + $0x30] sm:$0xff]
    %v34 = vld [vmem:[%s1 + $0x38] sm:$0xff]
    %v35 = vld [vmem:[%s2] sm:$0xf]
    %v36 = vld [vmem:[%s2 + $0x4] sm:$0xf]
    %v37 = vld [vmem:[%s2 + $0x8] sm:$0xf]
    %v38 = vld [vmem:[%s2 + $0xc] sm:$0xf]
    %v39 = vld [vmem:[%s2 + $0x10] sm:$0xf]
    %v40 = vld [vmem:[%s2 + $0x14] sm:$0xf]
    %v41 = vld [vmem:[%s2 + $0x18] sm:$0xf]
    %v42 = vld [vmem:[%s2 + $0x1c] sm:$0xf]
    %v43 = vld [vmem:[%s3] sm:$0xff]
    %v44 = vld [vmem:[%s3 + $0x8] sm:$0xff]
    %v45 = vld [vmem:[%s3 + $0x10] sm:$0xff]
    %v46 = vld [vmem:[%s3 + $0x18] sm:$0xff]
    %v47 = vld [vmem:[%s3 + $0x20] sm:$0xff]
    %v48 = vld [vmem:[%s3 + $0x28] sm:$0xff]
    %v49 = vld [vmem:[%s3 + $0x30] sm:$0xff]
    %v50 = vld [vmem:[%s3 + $0x38] sm:$0xff]
    %v51 = vld [vmem:[%s4] sm:$0xf]
    %v52 = vld [vmem:[%s4 + $0x4] sm:$0xf]
    %v53 = vld [vmem:[%s4 + $0x8] sm:$0xf]
    %v54 = vld [vmem:[%s4 + $0xc] sm:$0xf]
    %v55 = vld [vmem:[%s4 + $0x10] sm:$0xf]
    %v56 = vld [vmem:[%s4 + $0x14] sm:$0xf]
    %v57 = vld [vmem:[%s4 + $0x18] sm:$0xf]
    %v58 = vld [vmem:[%s4 + $0x1c] sm:$0xf]
    %v59 = vld [vmem:[%s4 + $0x20] sm:$0xf]
    %v60 = vld [vmem:[%s4 + $0x24] sm:$0xf]
    %v61 = vld [vmem:[%s4 + $0x28] sm:$0xf]
    %v62 = vld [vmem:[%s4 + $0x2c] sm:$0xf]
    %v63 = vld [vmem:[%s4 + $0x30] sm:$0xf]
    %v64 = vld [vmem:[%s4 + $0x34] sm:$0xf]
    %v65 = vld [vmem:[%s4 + $0x38] sm:$0xf]
    %v66 = vld [vmem:[%s4 + $0x3c] sm:$0xf]
    %v67 = vld [vmem:[%s4 + $0x40] sm:$0xf]
    %v68 = vld [vmem:[%s4 + $0x44] sm:$0xf]
    %v69 = vld [vmem:[%s4 + $0x48] sm:$0xf]
    %v70 = vld [vmem:[%s4 + $0x4c] sm:$0xf]
    %v71 = vld [vmem:[%s4 + $0x50] sm:$0xf]
    %v72 = vld [vmem:[%s4 + $0x54] sm:$0xf]
    %v73 = vld [vmem:[%s4 + $0x58] sm:$0xf]
    %v74 = vld [vmem:[%s4 + $0x5c] sm:$0xf]
    %v75 = vld [vmem:[%s4 + $0x60] sm:$0xf]
    %v76 = vld [vmem:[%s4 + $0x64] sm:$0xf]
    %v77 = vld [vmem:[%s4 + $0x68] sm:$0xf]
    %v78 = vld [vmem:[%s4 + $0x6c] sm:$0xf]
    %v79 = vld [vmem:[%s4 + $0x70] sm:$0xf]
    %v80 = vld [vmem:[%s4 + $0x74] sm:$0xf]
    %v81 = vld [vmem:[%s4 + $0x78] sm:$0xf]
    %v82 = vld [vmem:[%s4 + $0x7c] sm:$0xf]
    %v83 = vld [vmem:[%s5] ss:$0 sm:$0xff]
    %v84 = vld [vmem:[%s5 + $0x1] ss:$0 sm:$0xff]
    %v85 = vld [vmem:[%s5 + $0x2] ss:$0 sm:$0xff]
    %v86 = vld [vmem:[%s5 + $0x3] ss:$0 sm:$0xff]
    %s87 = scalar_lea.vmem %s5, 4
    %v88 = vld [vmem:[%s87] ss:$8 sm:$0x3]
    %v89 = vld [vmem:[%s5 + $0x5] ss:$0 sm:$0xff]
    %s90 = scalar_lea.vmem %s5, 6
    %v91 = vld [vmem:[%s90] ss:$8 sm:$0x3]
    %v92 = vld [vmem:[%s5 + $0x7] ss:$0 sm:$0xff]
    %vm93 = vcmask 523264
    %v94 = vsel %vm93, %v25, 0.0
    %95 = vadd.xlane.f32.xlu0 %v94
    %v96 = vpop.xlane.xlu0 %95
    %v97 = vsel %vm93, %v26, 0.0
    %98 = vadd.xlane.f32.xlu0 %v97
    %v99 = vpop.xlane.xlu0 %98
    %v100 = vrcp.pop 64.0
    %v101 = vmul.f32 %v96, %v100
    %v102 = vmul.f32 %v99, %v100
    %v103 = vsub.f32 %v25, %v101
    %v104 = vsub.f32 %v26, %v102
    %v105 = vmul.f32 %v103, %v103
    %v106 = vmul.f32 %v104, %v104
    %v107 = vsel %vm93, %v105, 0.0
    %108 = vadd.xlane.f32.xlu0 %v107
    %v109 = vpop.xlane.xlu0 %108
    %v110 = vsel %vm93, %v106, 0.0
    %111 = vadd.xlane.f32.xlu0 %v110
    %v112 = vpop.xlane.xlu0 %111
    %v113 = vmul.f32 %v109, %v100
    %v114 = vmul.f32 %v112, %v100
    %v115 = vadd.f32 %v113, 1e-05
    %v116 = vadd.f32 %v114, 1e-05
    %v117 = vrsqrt.pop %v115
    %v118 = vrsqrt.pop %v116
    %v119 = vmul.f32 %v103, %v117
    %v120 = vmul.f32 %v104, %v118
    %v121 = vmul.f32 %v119, %v83
    %v122 = vmul.f32 %v120, %v83
    %v123 = vadd.f32 %v121, %v84
    %v124 = vadd.f32 %v122, %v84
    %v125 = vpack.c.bf16 %v124, %v123
    %v127 = vlaneseq
    %v128 = vshrl.u32 %v127, 7
    %v129 = vsub.s32 0, %v128
    %v130 = vrot.slane %v88, %v129
    %v131 = vlaneseq
    %v132 = vshrl.u32 %v131, 7
    %v133 = vsub.s32 1, %v132
    %v134 = vrot.slane %v88, %v133
    %v145 = vunpack.c.l.b16 %v27
    %v146 = vunpack.c.h.b16 %v27
    %v147 = vunpack.c.l.b16 %v28
    %v148 = vunpack.c.h.b16 %v28
    %v149 = vunpack.c.l.b16 %v29
    %v150 = vunpack.c.h.b16 %v29
    %v151 = vunpack.c.l.b16 %v30
    %v152 = vunpack.c.h.b16 %v30
    %v153 = vunpack.c.l.b16 %v31
    %v154 = vunpack.c.h.b16 %v31
    %v155 = vunpack.c.l.b16 %v32
    %v156 = vunpack.c.h.b16 %v32
    %v157 = vunpack.c.l.b16 %v33
    %v158 = vunpack.c.h.b16 %v33
    %v159 = vunpack.c.l.b16 %v34
    %v160 = vunpack.c.h.b16 %v34
    %v161 = vpack.c.b16 %v147, %v145
    %v162 = vpack.c.b16 %v148, %v146
    %v163 = vpack.c.b16 %v151, %v149
    %v164 = vpack.c.b16 %v152, %v150
    %v165 = vpack.c.b16 %v155, %v153
    %v166 = vpack.c.b16 %v156, %v154
    %v167 = vpack.c.b16 %v159, %v157
    %v168 = vpack.c.b16 %v160, %v158
    %v178 = vsel %vm93, %v125, 0
    %180 = vmatprep.subr.bf16.mxu0 0
    %181 = vmatpush1.bf16.msra.mxu0 0
    %182 = vmatprep.subr.bf16.mxu0 0
    %183 = vmatpush1.bf16.msra.mxu0 0
    %184 = vmatprep.subr.bf16.mxu0 0
    %185 = vmatpush1.bf16.msra.mxu0 0
    %186 = vmatprep.subr.bf16.mxu0 0
    %187 = vmatpush1.bf16.msra.mxu0 0
    %188 = vmatprep.subr.bf16.mxu0 %v168
    %189 = vmatpush1.bf16.msra.mxu0 %v167
    %190 = vmatprep.subr.bf16.mxu0 %v166
    %191 = vmatpush1.bf16.msra.mxu0 %v165
    %192 = vmatprep.subr.bf16.mxu0 %v164
    %193 = vmatpush1.bf16.msra.mxu0 %v163
    %194 = vmatprep.subr.bf16.mxu0 %v162
    %195 = vmatpush1.bf16.msra.mxu0 %v161
    %196 = vmatprep.subr.bf16.mxu0 0
    %197 = vmatpush2.bf16.msra.mxu0 0
    %198 = vmatprep.subr.bf16.mxu0 0
    %199 = vmatpush2.bf16.msra.mxu0 0
    %200 = vmatprep.subr.bf16.mxu0 0
    %201 = vmatpush2.bf16.msra.mxu0 0
    %202 = vmatprep.subr.bf16.mxu0 0
    %203 = vmatpush2.bf16.msra.mxu0 0
    %204 = vmatprep.subr.bf16.mxu0 0
    %205 = vmatpush2.bf16.msra.mxu0 0
    %206 = vmatprep.subr.bf16.mxu0 0
    %207 = vmatpush2.bf16.msra.mxu0 0
    %208 = vmatprep.subr.bf16.mxu0 0
    %209 = vmatpush2.bf16.msra.mxu0 0
    %210 = vmatprep.subr.bf16.mxu0 0
    %211 = vmatpush2.bf16.msra.mxu0 0
    %212 = vmatprep.mubr.bf16.mxu0 0
    %213 = vmatmul.mubr.bf16.gmra.mxu0 %v178
    %v214 = vpop.f32.mrf.mxu0
    %v215 = vadd.f32 %v130, %v214
    %v216 = vpop.f32.mrf.mxu0
    %v217 = vadd.f32 %v134, %v216
    %v218 = vpop.f32.mrf.mxu0
    %v219 = vadd.f32 %v130, %v218
    %v220 = vpop.f32.mrf.mxu0
    %v221 = vadd.f32 %v134, %v220
    %222 = vdwg.mxu0
    %225 = vrot.lane.b32.xlu0 %v215, 112
    %v226 = vpop.permute.xlu0 %225
    %227 = vrot.lane.b32.xlu0 %v219, 112
    %v228 = vpop.permute.xlu0 %227
    %231 = vrot.lane.b32.xlu0 %v215, 96
    %v232 = vpop.permute.xlu0 %231
    %233 = vrot.lane.b32.xlu0 %v219, 96
    %v234 = vpop.permute.xlu0 %233
    %237 = vrot.lane.b32.xlu0 %v215, 80
    %v238 = vpop.permute.xlu0 %237
    %239 = vrot.lane.b32.xlu0 %v219, 80
    %v240 = vpop.permute.xlu0 %239
    %v243 = vpack.c.bf16 %v215, %v215
    %v244 = vpack.c.bf16 %v219, %v219
    %v245 = vpack.c.bf16 %v226, %v226
    %v246 = vpack.c.bf16 %v228, %v228
    %v247 = vpack.c.bf16 %v232, %v232
    %v248 = vpack.c.bf16 %v234, %v234
    %v249 = vpack.c.bf16 %v238, %v238
    %v250 = vpack.c.bf16 %v240, %v240
    %253 = vrot.lane.b32.xlu0 %v217, 112
    %v254 = vpop.permute.xlu0 %253
    %255 = vrot.lane.b32.xlu0 %v221, 112
    %v256 = vpop.permute.xlu0 %255
    %259 = vrot.lane.b32.xlu0 %v217, 96
    %v260 = vpop.permute.xlu0 %259
    %261 = vrot.lane.b32.xlu0 %v221, 96
    %v262 = vpop.permute.xlu0 %261
    %265 = vrot.lane.b32.xlu0 %v217, 80
    %v266 = vpop.permute.xlu0 %265
    %267 = vrot.lane.b32.xlu0 %v221, 80
    %v268 = vpop.permute.xlu0 %267
    %v271 = vpack.c.bf16 %v217, %v217
    %v272 = vpack.c.bf16 %v221, %v221
    %v273 = vpack.c.bf16 %v254, %v254
    %v274 = vpack.c.bf16 %v256, %v256
    %v275 = vpack.c.bf16 %v260, %v260
    %v276 = vpack.c.bf16 %v262, %v262
    %v277 = vpack.c.bf16 %v266, %v266
    %v278 = vpack.c.bf16 %v268, %v268
    %280 = vrot.lane.b32.xlu0 %v243, 64
    %v281 = vpop.permute.xlu0 %280
    %vm282 = vcmask 130048
    %v284 = vsel %vm282, %v243, 0
    %v287 = vsel %vm282, %v281, 0
    %289 = vmatprep.subr.bf16.mxu0 0
    %290 = vmatpush1.bf16.xpose.msra.mxu0 0
    %291 = vmatprep.subr.bf16.mxu0 0
    %292 = vmatpush1.bf16.xpose.msra.mxu0 0
    %293 = vmatprep.subr.bf16.mxu0 0
    %294 = vmatpush1.bf16.xpose.msra.mxu0 0
    %295 = vmatprep.subr.bf16.mxu0 0
    %296 = vmatpush1.bf16.xpose.msra.mxu0 0
    %297 = vmatprep.subr.bf16.mxu0 0
    %298 = vmatpush1.bf16.xpose.msra.mxu0 0
    %299 = vmatprep.subr.bf16.mxu0 0
    %300 = vmatpush1.bf16.xpose.msra.mxu0 0
    %301 = vmatprep.subr.bf16.mxu0 0
    %302 = vmatpush1.bf16.xpose.msra.mxu0 0
    %303 = vmatprep.subr.bf16.mxu0 0
    %304 = vmatpush1.bf16.xpose.msra.mxu0 %v287
    %305 = vmatprep.subr.bf16.mxu0 0
    %306 = vmatpush2.bf16.xpose.msra.mxu0 0
    %307 = vmatprep.subr.bf16.mxu0 0
    %308 = vmatpush2.bf16.xpose.msra.mxu0 0
    %309 = vmatprep.subr.bf16.mxu0 0
    %310 = vmatpush2.bf16.xpose.msra.mxu0 0
    %311 = vmatprep.subr.bf16.mxu0 0
    %312 = vmatpush2.bf16.xpose.msra.mxu0 0
    %313 = vmatprep.subr.bf16.mxu0 0
    %314 = vmatpush2.bf16.xpose.msra.mxu0 0
    %315 = vmatprep.subr.bf16.mxu0 0
    %316 = vmatpush2.bf16.xpose.msra.mxu0 0
    %317 = vmatprep.subr.bf16.mxu0 0
    %318 = vmatpush2.bf16.xpose.msra.mxu0 0
    %319 = vmatprep.subr.bf16.mxu0 0
    %320 = vmatpush2.bf16.xpose.msra.mxu0 0
    %321 = vmatprep.mubr.bf16.mxu0 0
    %322 = vmatmul.mubr.bf16.gmra.mxu0 %v284
    %v323 = vpop.f32.mrf.mxu0
    %v324 = vadd.f32 0.0, %v323
    %v325 = vpop.f32.mrf.mxu0
    %v326 = vpop.f32.mrf.mxu0
    %v327 = vpop.f32.mrf.mxu0
    %328 = vdwg.mxu0
    %330 = vrot.lane.b32.xlu0 %v244, 64
    %v331 = vpop.permute.xlu0 %330
    %v333 = vsel %vm282, %v244, 0
    %v336 = vsel %vm282, %v331, 0
    %338 = vmatprep.subr.bf16.mxu0 0
    %339 = vmatpush1.bf16.xpose.msra.mxu0 0
    %340 = vmatprep.subr.bf16.mxu0 0
    %341 = vmatpush1.bf16.xpose.msra.mxu0 0
    %342 = vmatprep.subr.bf16.mxu0 0
    %343 = vmatpush1.bf16.xpose.msra.mxu0 0
    %344 = vmatprep.subr.bf16.mxu0 0
    %345 = vmatpush1.bf16.xpose.msra.mxu0 0
    %346 = vmatprep.subr.bf16.mxu0 0
    %347 = vmatpush1.bf16.xpose.msra.mxu0 0
    %348 = vmatprep.subr.bf16.mxu0 0
    %349 = vmatpush1.bf16.xpose.msra.mxu0 0
    %350 = vmatprep.subr.bf16.mxu0 0
    %351 = vmatpush1.bf16.xpose.msra.mxu0 0
    %352 = vmatprep.subr.bf16.mxu0 0
    %353 = vmatpush1.bf16.xpose.msra.mxu0 %v336
    %354 = vmatprep.subr.bf16.mxu0 0
    %355 = vmatpush2.bf16.xpose.msra.mxu0 0
    %356 = vmatprep.subr.bf16.mxu0 0
    %357 = vmatpush2.bf16.xpose.msra.mxu0 0
    %358 = vmatprep.subr.bf16.mxu0 0
    %359 = vmatpush2.bf16.xpose.msra.mxu0 0
    %360 = vmatprep.subr.bf16.mxu0 0
    %361 = vmatpush2.bf16.xpose.msra.mxu0 0
    %362 = vmatprep.subr.bf16.mxu0 0
    %363 = vmatpush2.bf16.xpose.msra.mxu0 0
    %364 = vmatprep.subr.bf16.mxu0 0
    %365 = vmatpush2.bf16.xpose.msra.mxu0 0
    %366 = vmatprep.subr.bf16.mxu0 0
    %367 = vmatpush2.bf16.xpose.msra.mxu0 0
    %368 = vmatprep.subr.bf16.mxu0 0
    %369 = vmatpush2.bf16.xpose.msra.mxu0 0
    %370 = vmatprep.mubr.bf16.mxu0 0
    %371 = vmatmul.mubr.bf16.gmra.mxu0 %v333
    %v372 = vpop.f32.mrf.mxu0
    %v373 = vadd.f32 0.0, %v372
    %v374 = vpop.f32.mrf.mxu0
    %v375 = vpop.f32.mrf.mxu0
    %v376 = vpop.f32.mrf.mxu0
    %377 = vdwg.mxu0
    %379 = vrot.lane.b32.xlu0 %v245, 64
    %v380 = vpop.permute.xlu0 %379
    %v382 = vsel %vm282, %v245, 0
    %v385 = vsel %vm282, %v380, 0
    %387 = vmatprep.subr.bf16.mxu0 0
    %388 = vmatpush1.bf16.xpose.msra.mxu0 0
    %389 = vmatprep.subr.bf16.mxu0 0
    %390 = vmatpush1.bf16.xpose.msra.mxu0 0
    %391 = vmatprep.subr.bf16.mxu0 0
    %392 = vmatpush1.bf16.xpose.msra.mxu0 0
    %393 = vmatprep.subr.bf16.mxu0 0
    %394 = vmatpush1.bf16.xpose.msra.mxu0 0
    %395 = vmatprep.subr.bf16.mxu0 0
    %396 = vmatpush1.bf16.xpose.msra.mxu0 0
    %397 = vmatprep.subr.bf16.mxu0 0
    %398 = vmatpush1.bf16.xpose.msra.mxu0 0
    %399 = vmatprep.subr.bf16.mxu0 0
    %400 = vmatpush1.bf16.xpose.msra.mxu0 0
    %401 = vmatprep.subr.bf16.mxu0 0
    %402 = vmatpush1.bf16.xpose.msra.mxu0 %v385
    %403 = vmatprep.subr.bf16.mxu0 0
    %404 = vmatpush2.bf16.xpose.msra.mxu0 0
    %405 = vmatprep.subr.bf16.mxu0 0
    %406 = vmatpush2.bf16.xpose.msra.mxu0 0
    %407 = vmatprep.subr.bf16.mxu0 0
    %408 = vmatpush2.bf16.xpose.msra.mxu0 0
    %409 = vmatprep.subr.bf16.mxu0 0
    %410 = vmatpush2.bf16.xpose.msra.mxu0 0
    %411 = vmatprep.subr.bf16.mxu0 0
    %412 = vmatpush2.bf16.xpose.msra.mxu0 0
    %413 = vmatprep.subr.bf16.mxu0 0
    %414 = vmatpush2.bf16.xpose.msra.mxu0 0
    %415 = vmatprep.subr.bf16.mxu0 0
    %416 = vmatpush2.bf16.xpose.msra.mxu0 0
    %417 = vmatprep.subr.bf16.mxu0 0
    %418 = vmatpush2.bf16.xpose.msra.mxu0 0
    %419 = vmatprep.mubr.bf16.mxu0 0
    %420 = vmatmul.mubr.bf16.gmra.mxu0 %v382
    %v421 = vpop.f32.mrf.mxu0
    %v422 = vadd.f32 0.0, %v421
    %v423 = vpop.f32.mrf.mxu0
    %v424 = vpop.f32.mrf.mxu0
    %v425 = vpop.f32.mrf.mxu0
    %426 = vdwg.mxu0
    %428 = vrot.lane.b32.xlu0 %v246, 64
    %v429 = vpop.permute.xlu0 %428
    %v431 = vsel %vm282, %v246, 0
    %v434 = vsel %vm282, %v429, 0
    %436 = vmatprep.subr.bf16.mxu0 0
    %437 = vmatpush1.bf16.xpose.msra.mxu0 0
    %438 = vmatprep.subr.bf16.mxu0 0
    %439 = vmatpush1.bf16.xpose.msra.mxu0 0
    %440 = vmatprep.subr.bf16.mxu0 0
    %441 = vmatpush1.bf16.xpose.msra.mxu0 0
    %442 = vmatprep.subr.bf16.mxu0 0
    %443 = vmatpush1.bf16.xpose.msra.mxu0 0
    %444 = vmatprep.subr.bf16.mxu0 0
    %445 = vmatpush1.bf16.xpose.msra.mxu0 0
    %446 = vmatprep.subr.bf16.mxu0 0
    %447 = vmatpush1.bf16.xpose.msra.mxu0 0
    %448 = vmatprep.subr.bf16.mxu0 0
    %449 = vmatpush1.bf16.xpose.msra.mxu0 0
    %450 = vmatprep.subr.bf16.mxu0 0
    %451 = vmatpush1.bf16.xpose.msra.mxu0 %v434
    %452 = vmatprep.subr.bf16.mxu0 0
    %453 = vmatpush2.bf16.xpose.msra.mxu0 0
    %454 = vmatprep.subr.bf16.mxu0 0
    %455 = vmatpush2.bf16.xpose.msra.mxu0 0
    %456 = vmatprep.subr.bf16.mxu0 0
    %457 = vmatpush2.bf16.xpose.msra.mxu0 0
    %458 = vmatprep.subr.bf16.mxu0 0
    %459 = vmatpush2.bf16.xpose.msra.mxu0 0
    %460 = vmatprep.subr.bf16.mxu0 0
    %461 = vmatpush2.bf16.xpose.msra.mxu0 0
    %462 = vmatprep.subr.bf16.mxu0 0
    %463 = vmatpush2.bf16.xpose.msra.mxu0 0
    %464 = vmatprep.subr.bf16.mxu0 0
    %465 = vmatpush2.bf16.xpose.msra.mxu0 0
    %466 = vmatprep.subr.bf16.mxu0 0
    %467 = vmatpush2.bf16.xpose.msra.mxu0 0
    %468 = vmatprep.mubr.bf16.mxu0 0
    %469 = vmatmul.mubr.bf16.gmra.mxu0 %v431
    %v470 = vpop.f32.mrf.mxu0
    %v471 = vadd.f32 0.0, %v470
    %v472 = vpop.f32.mrf.mxu0
    %v473 = vpop.f32.mrf.mxu0
    %v474 = vpop.f32.mrf.mxu0
    %475 = vdwg.mxu0
    %477 = vrot.lane.b32.xlu0 %v247, 64
    %v478 = vpop.permute.xlu0 %477
    %v480 = vsel %vm282, %v247, 0
    %v483 = vsel %vm282, %v478, 0
    %485 = vmatprep.subr.bf16.mxu0 0
    %486 = vmatpush1.bf16.xpose.msra.mxu0 0
    %487 = vmatprep.subr.bf16.mxu0 0
    %488 = vmatpush1.bf16.xpose.msra.mxu0 0
    %489 = vmatprep.subr.bf16.mxu0 0
    %490 = vmatpush1.bf16.xpose.msra.mxu0 0
    %491 = vmatprep.subr.bf16.mxu0 0
    %492 = vmatpush1.bf16.xpose.msra.mxu0 0
    %493 = vmatprep.subr.bf16.mxu0 0
    %494 = vmatpush1.bf16.xpose.msra.mxu0 0
    %495 = vmatprep.subr.bf16.mxu0 0
    %496 = vmatpush1.bf16.xpose.msra.mxu0 0
    %497 = vmatprep.subr.bf16.mxu0 0
    %498 = vmatpush1.bf16.xpose.msra.mxu0 0
    %499 = vmatprep.subr.bf16.mxu0 0
    %500 = vmatpush1.bf16.xpose.msra.mxu0 %v483
    %501 = vmatprep.subr.bf16.mxu0 0
    %502 = vmatpush2.bf16.xpose.msra.mxu0 0
    %503 = vmatprep.subr.bf16.mxu0 0
    %504 = vmatpush2.bf16.xpose.msra.mxu0 0
    %505 = vmatprep.subr.bf16.mxu0 0
    %506 = vmatpush2.bf16.xpose.msra.mxu0 0
    %507 = vmatprep.subr.bf16.mxu0 0
    %508 = vmatpush2.bf16.xpose.msra.mxu0 0
    %509 = vmatprep.subr.bf16.mxu0 0
    %510 = vmatpush2.bf16.xpose.msra.mxu0 0
    %511 = vmatprep.subr.bf16.mxu0 0
    %512 = vmatpush2.bf16.xpose.msra.mxu0 0
    %513 = vmatprep.subr.bf16.mxu0 0
    %514 = vmatpush2.bf16.xpose.msra.mxu0 0
    %515 = vmatprep.subr.bf16.mxu0 0
    %516 = vmatpush2.bf16.xpose.msra.mxu0 0
    %517 = vmatprep.mubr.bf16.mxu0 0
    %518 = vmatmul.mubr.bf16.gmra.mxu0 %v480
    %v519 = vpop.f32.mrf.mxu0
    %v520 = vadd.f32 0.0, %v519
    %v521 = vpop.f32.mrf.mxu0
    %v522 = vpop.f32.mrf.mxu0
    %v523 = vpop.f32.mrf.mxu0
    %524 = vdwg.mxu0
    %526 = vrot.lane.b32.xlu0 %v248, 64
    %v527 = vpop.permute.xlu0 %526
    %v529 = vsel %vm282, %v248, 0
    %v532 = vsel %vm282, %v527, 0
    %534 = vmatprep.subr.bf16.mxu0 0
    %535 = vmatpush1.bf16.xpose.msra.mxu0 0
    %536 = vmatprep.subr.bf16.mxu0 0
    %537 = vmatpush1.bf16.xpose.msra.mxu0 0
    %538 = vmatprep.subr.bf16.mxu0 0
    %539 = vmatpush1.bf16.xpose.msra.mxu0 0
    %540 = vmatprep.subr.bf16.mxu0 0
    %541 = vmatpush1.bf16.xpose.msra.mxu0 0
    %542 = vmatprep.subr.bf16.mxu0 0
    %543 = vmatpush1.bf16.xpose.msra.mxu0 0
    %544 = vmatprep.subr.bf16.mxu0 0
    %545 = vmatpush1.bf16.xpose.msra.mxu0 0
    %546 = vmatprep.subr.bf16.mxu0 0
    %547 = vmatpush1.bf16.xpose.msra.mxu0 0
    %548 = vmatprep.subr.bf16.mxu0 0
    %549 = vmatpush1.bf16.xpose.msra.mxu0 %v532
    %550 = vmatprep.subr.bf16.mxu0 0
    %551 = vmatpush2.bf16.xpose.msra.mxu0 0
    %552 = vmatprep.subr.bf16.mxu0 0
    %553 = vmatpush2.bf16.xpose.msra.mxu0 0
    %554 = vmatprep.subr.bf16.mxu0 0
    %555 = vmatpush2.bf16.xpose.msra.mxu0 0
    %556 = vmatprep.subr.bf16.mxu0 0
    %557 = vmatpush2.bf16.xpose.msra.mxu0 0
    %558 = vmatprep.subr.bf16.mxu0 0
    %559 = vmatpush2.bf16.xpose.msra.mxu0 0
    %560 = vmatprep.subr.bf16.mxu0 0
    %561 = vmatpush2.bf16.xpose.msra.mxu0 0
    %562 = vmatprep.subr.bf16.mxu0 0
    %563 = vmatpush2.bf16.xpose.msra.mxu0 0
    %564 = vmatprep.subr.bf16.mxu0 0
    %565 = vmatpush2.bf16.xpose.msra.mxu0 0
    %566 = vmatprep.mubr.bf16.mxu0 0
    %567 = vmatmul.mubr.bf16.gmra.mxu0 %v529
    %v568 = vpop.f32.mrf.mxu0
    %v569 = vadd.f32 0.0, %v568
    %v570 = vpop.f32.mrf.mxu0
    %v571 = vpop.f32.mrf.mxu0
    %v572 = vpop.f32.mrf.mxu0
    %573 = vdwg.mxu0
    %575 = vrot.lane.b32.xlu0 %v249, 64
    %v576 = vpop.permute.xlu0 %575
    %v578 = vsel %vm282, %v249, 0
    %v581 = vsel %vm282, %v576, 0
    %583 = vmatprep.subr.bf16.mxu0 0
    %584 = vmatpush1.bf16.xpose.msra.mxu0 0
    %585 = vmatprep.subr.bf16.mxu0 0
    %586 = vmatpush1.bf16.xpose.msra.mxu0 0
    %587 = vmatprep.subr.bf16.mxu0 0
    %588 = vmatpush1.bf16.xpose.msra.mxu0 0
    %589 = vmatprep.subr.bf16.mxu0 0
    %590 = vmatpush1.bf16.xpose.msra.mxu0 0
    %591 = vmatprep.subr.bf16.mxu0 0
    %592 = vmatpush1.bf16.xpose.msra.mxu0 0
    %593 = vmatprep.subr.bf16.mxu0 0
    %594 = vmatpush1.bf16.xpose.msra.mxu0 0
    %595 = vmatprep.subr.bf16.mxu0 0
    %596 = vmatpush1.bf16.xpose.msra.mxu0 0
    %597 = vmatprep.subr.bf16.mxu0 0
    %598 = vmatpush1.bf16.xpose.msra.mxu0 %v581
    %599 = vmatprep.subr.bf16.mxu0 0
    %600 = vmatpush2.bf16.xpose.msra.mxu0 0
    %601 = vmatprep.subr.bf16.mxu0 0
    %602 = vmatpush2.bf16.xpose.msra.mxu0 0
    %603 = vmatprep.subr.bf16.mxu0 0
    %604 = vmatpush2.bf16.xpose.msra.mxu0 0
    %605 = vmatprep.subr.bf16.mxu0 0
    %606 = vmatpush2.bf16.xpose.msra.mxu0 0
    %607 = vmatprep.subr.bf16.mxu0 0
    %608 = vmatpush2.bf16.xpose.msra.mxu0 0
    %609 = vmatprep.subr.bf16.mxu0 0
    %610 = vmatpush2.bf16.xpose.msra.mxu0 0
    %611 = vmatprep.subr.bf16.mxu0 0
    %612 = vmatpush2.bf16.xpose.msra.mxu0 0
    %613 = vmatprep.subr.bf16.mxu0 0
    %614 = vmatpush2.bf16.xpose.msra.mxu0 0
    %615 = vmatprep.mubr.bf16.mxu0 0
    %616 = vmatmul.mubr.bf16.gmra.mxu0 %v578
    %v617 = vpop.f32.mrf.mxu0
    %v618 = vadd.f32 0.0, %v617
    %v619 = vpop.f32.mrf.mxu0
    %v620 = vpop.f32.mrf.mxu0
    %v621 = vpop.f32.mrf.mxu0
    %622 = vdwg.mxu0
    %624 = vrot.lane.b32.xlu0 %v250, 64
    %v625 = vpop.permute.xlu0 %624
    %v627 = vsel %vm282, %v250, 0
    %v630 = vsel %vm282, %v625, 0
    %632 = vmatprep.subr.bf16.mxu0 0
    %633 = vmatpush1.bf16.xpose.msra.mxu0 0
    %634 = vmatprep.subr.bf16.mxu0 0
    %635 = vmatpush1.bf16.xpose.msra.mxu0 0
    %636 = vmatprep.subr.bf16.mxu0 0
    %637 = vmatpush1.bf16.xpose.msra.mxu0 0
    %638 = vmatprep.subr.bf16.mxu0 0
    %639 = vmatpush1.bf16.xpose.msra.mxu0 0
    %640 = vmatprep.subr.bf16.mxu0 0
    %641 = vmatpush1.bf16.xpose.msra.mxu0 0
    %642 = vmatprep.subr.bf16.mxu0 0
    %643 = vmatpush1.bf16.xpose.msra.mxu0 0
    %644 = vmatprep.subr.bf16.mxu0 0
    %645 = vmatpush1.bf16.xpose.msra.mxu0 0
    %646 = vmatprep.subr.bf16.mxu0 0
    %647 = vmatpush1.bf16.xpose.msra.mxu0 %v630
    %648 = vmatprep.subr.bf16.mxu0 0
    %649 = vmatpush2.bf16.xpose.msra.mxu0 0
    %650 = vmatprep.subr.bf16.mxu0 0
    %651 = vmatpush2.bf16.xpose.msra.mxu0 0
    %652 = vmatprep.subr.bf16.mxu0 0
    %653 = vmatpush2.bf16.xpose.msra.mxu0 0
    %654 = vmatprep.subr.bf16.mxu0 0
    %655 = vmatpush2.bf16.xpose.msra.mxu0 0
    %656 = vmatprep.subr.bf16.mxu0 0
    %657 = vmatpush2.bf16.xpose.msra.mxu0 0
    %658 = vmatprep.subr.bf16.mxu0 0
    %659 = vmatpush2.bf16.xpose.msra.mxu0 0
    %660 = vmatprep.subr.bf16.mxu0 0
    %661 = vmatpush2.bf16.xpose.msra.mxu0 0
    %662 = vmatprep.subr.bf16.mxu0 0
    %663 = vmatpush2.bf16.xpose.msra.mxu0 0
    %664 = vmatprep.mubr.bf16.mxu0 0
    %665 = vmatmul.mubr.bf16.gmra.mxu0 %v627
    %v666 = vpop.f32.mrf.mxu0
    %v667 = vadd.f32 0.0, %v666
    %v668 = vpop.f32.mrf.mxu0
    %v669 = vpop.f32.mrf.mxu0
    %v670 = vpop.f32.mrf.mxu0
    %671 = vdwg.mxu0
    %vm672 = vcmask 64512
    %v673 = vsel %vm672, %v324, -inf
    %674 = vmax.xlane.f32.xlu0 %v673
    %v675 = vpop.xlane.xlu0 %674
    %v676 = vsel %vm672, %v373, -inf
    %677 = vmax.xlane.f32.xlu0 %v676
    %v678 = vpop.xlane.xlu0 %677
    %v679 = vsel %vm672, %v422, -inf
    %680 = vmax.xlane.f32.xlu0 %v679
    %v681 = vpop.xlane.xlu0 %680
    %v682 = vsel %vm672, %v471, -inf
    %683 = vmax.xlane.f32.xlu0 %v682
    %v684 = vpop.xlane.xlu0 %683
    %v685 = vsel %vm672, %v520, -inf
    %686 = vmax.xlane.f32.xlu0 %v685
    %v687 = vpop.xlane.xlu0 %686
    %v688 = vsel %vm672, %v569, -inf
    %689 = vmax.xlane.f32.xlu0 %v688
    %v690 = vpop.xlane.xlu0 %689
    %v691 = vsel %vm672, %v618, -inf
    %692 = vmax.xlane.f32.xlu0 %v691
    %v693 = vpop.xlane.xlu0 %692
    %v694 = vsel %vm672, %v667, -inf
    %695 = vmax.xlane.f32.xlu0 %v694
    %v696 = vpop.xlane.xlu0 %695
    %v697 = vsub.f32 %v324, %v675
    %v698 = vsub.f32 %v373, %v678
    %v699 = vsub.f32 %v422, %v681
    %v700 = vsub.f32 %v471, %v684
    %v701 = vsub.f32 %v520, %v687
    %v702 = vsub.f32 %v569, %v690
    %v703 = vsub.f32 %v618, %v693
    %v704 = vsub.f32 %v667, %v696
    %v705 = vmul.f32 %v697, 1.442695
    %v706 = vpow.pop %v705
    %v707 = vmul.f32 %v698, 1.442695
    %v708 = vpow.pop %v707
    %v709 = vmul.f32 %v699, 1.442695
    %v710 = vpow.pop %v709
    %v711 = vmul.f32 %v700, 1.442695
    %v712 = vpow.pop %v711
    %v713 = vmul.f32 %v701, 1.442695
    %v714 = vpow.pop %v713
    %v715 = vmul.f32 %v702, 1.442695
    %v716 = vpow.pop %v715
    %v717 = vmul.f32 %v703, 1.442695
    %v718 = vpow.pop %v717
    %v719 = vmul.f32 %v704, 1.442695
    %v720 = vpow.pop %v719
    %v721 = vsel %vm672, %v706, 0.0
    %722 = vadd.xlane.f32.xlu0 %v721
    %v723 = vpop.xlane.xlu0 %722
    %v724 = vsel %vm672, %v708, 0.0
    %725 = vadd.xlane.f32.xlu0 %v724
    %v726 = vpop.xlane.xlu0 %725
    %v727 = vsel %vm672, %v710, 0.0
    %728 = vadd.xlane.f32.xlu0 %v727
    %v729 = vpop.xlane.xlu0 %728
    %v730 = vsel %vm672, %v712, 0.0
    %731 = vadd.xlane.f32.xlu0 %v730
    %v732 = vpop.xlane.xlu0 %731
    %v733 = vsel %vm672, %v714, 0.0
    %734 = vadd.xlane.f32.xlu0 %v733
    %v735 = vpop.xlane.xlu0 %734
    %v736 = vsel %vm672, %v716, 0.0
    %737 = vadd.xlane.f32.xlu0 %v736
    %v738 = vpop.xlane.xlu0 %737
    %v739 = vsel %vm672, %v718, 0.0
    %740 = vadd.xlane.f32.xlu0 %v739
    %v741 = vpop.xlane.xlu0 %740
    %v742 = vsel %vm672, %v720, 0.0
    %743 = vadd.xlane.f32.xlu0 %v742
    %v744 = vpop.xlane.xlu0 %743
    %v745 = vrcp.pop %v723
    %v746 = vrcp.pop %v726
    %v747 = vrcp.pop %v729
    %v748 = vrcp.pop %v732
    %v749 = vrcp.pop %v735
    %v750 = vrcp.pop %v738
    %v751 = vrcp.pop %v741
    %v752 = vrcp.pop %v744
    %v753 = vmul.f32 %v706, %v745
    %v754 = vmul.f32 %v708, %v746
    %v755 = vmul.f32 %v710, %v747
    %v756 = vmul.f32 %v712, %v748
    %v757 = vmul.f32 %v714, %v749
    %v758 = vmul.f32 %v716, %v750
    %v759 = vmul.f32 %v718, %v751
    %v760 = vmul.f32 %v720, %v752
    %v761 = vpack.c.bf16 %v753, %v753
    %v762 = vpack.c.bf16 %v754, %v754
    %v763 = vpack.c.bf16 %v755, %v755
    %v764 = vpack.c.bf16 %v756, %v756
    %v765 = vpack.c.bf16 %v757, %v757
    %v766 = vpack.c.bf16 %v758, %v758
    %v767 = vpack.c.bf16 %v759, %v759
    %v768 = vpack.c.bf16 %v760, %v760
    %v770 = vsel %vm672, %v761, 0
    %vm772 = vcmask 1043456
    %v774 = vsel %vm772, %v271, 0
    %776 = vmatprep.subr.bf16.mxu0 0
    %777 = vmatpush1.bf16.msra.mxu0 0
    %778 = vmatprep.subr.bf16.mxu0 0
    %779 = vmatpush1.bf16.msra.mxu0 0
    %780 = vmatprep.subr.bf16.mxu0 0
    %781 = vmatpush1.bf16.msra.mxu0 0
    %782 = vmatprep.subr.bf16.mxu0 0
    %783 = vmatpush1.bf16.msra.mxu0 0
    %784 = vmatprep.subr.bf16.mxu0 0
    %785 = vmatpush1.bf16.msra.mxu0 0
    %786 = vmatprep.subr.bf16.mxu0 0
    %787 = vmatpush1.bf16.msra.mxu0 0
    %788 = vmatprep.subr.bf16.mxu0 0
    %789 = vmatpush1.bf16.msra.mxu0 0
    %790 = vmatprep.subr.bf16.mxu0 0
    %791 = vmatpush1.bf16.msra.mxu0 %v774
    %792 = vmatprep.subr.bf16.mxu0 0
    %793 = vmatpush2.bf16.msra.mxu0 0
    %794 = vmatprep.subr.bf16.mxu0 0
    %795 = vmatpush2.bf16.msra.mxu0 0
    %796 = vmatprep.subr.bf16.mxu0 0
    %797 = vmatpush2.bf16.msra.mxu0 0
    %798 = vmatprep.subr.bf16.mxu0 0
    %799 = vmatpush2.bf16.msra.mxu0 0
    %800 = vmatprep.subr.bf16.mxu0 0
    %801 = vmatpush2.bf16.msra.mxu0 0
    %802 = vmatprep.subr.bf16.mxu0 0
    %803 = vmatpush2.bf16.msra.mxu0 0
    %804 = vmatprep.subr.bf16.mxu0 0
    %805 = vmatpush2.bf16.msra.mxu0 0
    %806 = vmatprep.subr.bf16.mxu0 0
    %807 = vmatpush2.bf16.msra.mxu0 0
    %808 = vmatprep.mubr.bf16.mxu0 0
    %809 = vmatmul.mubr.bf16.gmra.mxu0 %v770
    %v810 = vpop.f32.mrf.mxu0
    %v811 = vadd.f32 0.0, %v810
    %v812 = vpop.f32.mrf.mxu0
    %v813 = vpop.f32.mrf.mxu0
    %v814 = vpop.f32.mrf.mxu0
    %815 = vdwg.mxu0
    %v817 = vsel %vm672, %v762, 0
    %v820 = vsel %vm772, %v272, 0
    %822 = vmatprep.subr.bf16.mxu0 0
    %823 = vmatpush1.bf16.msra.mxu0 0
    %824 = vmatprep.subr.bf16.mxu0 0
    %825 = vmatpush1.bf16.msra.mxu0 0
    %826 = vmatprep.subr.bf16.mxu0 0
    %827 = vmatpush1.bf16.msra.mxu0 0
    %828 = vmatprep.subr.bf16.mxu0 0
    %829 = vmatpush1.bf16.msra.mxu0 0
    %830 = vmatprep.subr.bf16.mxu0 0
    %831 = vmatpush1.bf16.msra.mxu0 0
    %832 = vmatprep.subr.bf16.mxu0 0
    %833 = vmatpush1.bf16.msra.mxu0 0
    %834 = vmatprep.subr.bf16.mxu0 0
    %835 = vmatpush1.bf16.msra.mxu0 0
    %836 = vmatprep.subr.bf16.mxu0 0
    %837 = vmatpush1.bf16.msra.mxu0 %v820
    %838 = vmatprep.subr.bf16.mxu0 0
    %839 = vmatpush2.bf16.msra.mxu0 0
    %840 = vmatprep.subr.bf16.mxu0 0
    %841 = vmatpush2.bf16.msra.mxu0 0
    %842 = vmatprep.subr.bf16.mxu0 0
    %843 = vmatpush2.bf16.msra.mxu0 0
    %844 = vmatprep.subr.bf16.mxu0 0
    %845 = vmatpush2.bf16.msra.mxu0 0
    %846 = vmatprep.subr.bf16.mxu0 0
    %847 = vmatpush2.bf16.msra.mxu0 0
    %848 = vmatprep.subr.bf16.mxu0 0
    %849 = vmatpush2.bf16.msra.mxu0 0
    %850 = vmatprep.subr.bf16.mxu0 0
    %851 = vmatpush2.bf16.msra.mxu0 0
    %852 = vmatprep.subr.bf16.mxu0 0
    %853 = vmatpush2.bf16.msra.mxu0 0
    %854 = vmatprep.mubr.bf16.mxu0 0
    %855 = vmatmul.mubr.bf16.gmra.mxu0 %v817
    %v856 = vpop.f32.mrf.mxu0
    %v857 = vadd.f32 0.0, %v856
    %v858 = vpop.f32.mrf.mxu0
    %v859 = vpop.f32.mrf.mxu0
    %v860 = vpop.f32.mrf.mxu0
    %861 = vdwg.mxu0
    %v863 = vsel %vm672, %v763, 0
    %v866 = vsel %vm772, %v273, 0
    %868 = vmatprep.subr.bf16.mxu0 0
    %869 = vmatpush1.bf16.msra.mxu0 0
    %870 = vmatprep.subr.bf16.mxu0 0
    %871 = vmatpush1.bf16.msra.mxu0 0
    %872 = vmatprep.subr.bf16.mxu0 0
    %873 = vmatpush1.bf16.msra.mxu0 0
    %874 = vmatprep.subr.bf16.mxu0 0
    %875 = vmatpush1.bf16.msra.mxu0 0
    %876 = vmatprep.subr.bf16.mxu0 0
    %877 = vmatpush1.bf16.msra.mxu0 0
    %878 = vmatprep.subr.bf16.mxu0 0
    %879 = vmatpush1.bf16.msra.mxu0 0
    %880 = vmatprep.subr.bf16.mxu0 0
    %881 = vmatpush1.bf16.msra.mxu0 0
    %882 = vmatprep.subr.bf16.mxu0 0
    %883 = vmatpush1.bf16.msra.mxu0 %v866
    %884 = vmatprep.subr.bf16.mxu0 0
    %885 = vmatpush2.bf16.msra.mxu0 0
    %886 = vmatprep.subr.bf16.mxu0 0
    %887 = vmatpush2.bf16.msra.mxu0 0
    %888 = vmatprep.subr.bf16.mxu0 0
    %889 = vmatpush2.bf16.msra.mxu0 0
    %890 = vmatprep.subr.bf16.mxu0 0
    %891 = vmatpush2.bf16.msra.mxu0 0
    %892 = vmatprep.subr.bf16.mxu0 0
    %893 = vmatpush2.bf16.msra.mxu0 0
    %894 = vmatprep.subr.bf16.mxu0 0
    %895 = vmatpush2.bf16.msra.mxu0 0
    %896 = vmatprep.subr.bf16.mxu0 0
    %897 = vmatpush2.bf16.msra.mxu0 0
    %898 = vmatprep.subr.bf16.mxu0 0
    %899 = vmatpush2.bf16.msra.mxu0 0
    %900 = vmatprep.mubr.bf16.mxu0 0
    %901 = vmatmul.mubr.bf16.gmra.mxu0 %v863
    %v902 = vpop.f32.mrf.mxu0
    %v903 = vadd.f32 0.0, %v902
    %v904 = vpop.f32.mrf.mxu0
    %v905 = vpop.f32.mrf.mxu0
    %v906 = vpop.f32.mrf.mxu0
    %907 = vdwg.mxu0
    %v909 = vsel %vm672, %v764, 0
    %v912 = vsel %vm772, %v274, 0
    %914 = vmatprep.subr.bf16.mxu0 0
    %915 = vmatpush1.bf16.msra.mxu0 0
    %916 = vmatprep.subr.bf16.mxu0 0
    %917 = vmatpush1.bf16.msra.mxu0 0
    %918 = vmatprep.subr.bf16.mxu0 0
    %919 = vmatpush1.bf16.msra.mxu0 0
    %920 = vmatprep.subr.bf16.mxu0 0
    %921 = vmatpush1.bf16.msra.mxu0 0
    %922 = vmatprep.subr.bf16.mxu0 0
    %923 = vmatpush1.bf16.msra.mxu0 0
    %924 = vmatprep.subr.bf16.mxu0 0
    %925 = vmatpush1.bf16.msra.mxu0 0
    %926 = vmatprep.subr.bf16.mxu0 0
    %927 = vmatpush1.bf16.msra.mxu0 0
    %928 = vmatprep.subr.bf16.mxu0 0
    %929 = vmatpush1.bf16.msra.mxu0 %v912
    %930 = vmatprep.subr.bf16.mxu0 0
    %931 = vmatpush2.bf16.msra.mxu0 0
    %932 = vmatprep.subr.bf16.mxu0 0
    %933 = vmatpush2.bf16.msra.mxu0 0
    %934 = vmatprep.subr.bf16.mxu0 0
    %935 = vmatpush2.bf16.msra.mxu0 0
    %936 = vmatprep.subr.bf16.mxu0 0
    %937 = vmatpush2.bf16.msra.mxu0 0
    %938 = vmatprep.subr.bf16.mxu0 0
    %939 = vmatpush2.bf16.msra.mxu0 0
    %940 = vmatprep.subr.bf16.mxu0 0
    %941 = vmatpush2.bf16.msra.mxu0 0
    %942 = vmatprep.subr.bf16.mxu0 0
    %943 = vmatpush2.bf16.msra.mxu0 0
    %944 = vmatprep.subr.bf16.mxu0 0
    %945 = vmatpush2.bf16.msra.mxu0 0
    %946 = vmatprep.mubr.bf16.mxu0 0
    %947 = vmatmul.mubr.bf16.gmra.mxu0 %v909
    %v948 = vpop.f32.mrf.mxu0
    %v949 = vadd.f32 0.0, %v948
    %v950 = vpop.f32.mrf.mxu0
    %v951 = vpop.f32.mrf.mxu0
    %v952 = vpop.f32.mrf.mxu0
    %953 = vdwg.mxu0
    %v955 = vsel %vm672, %v765, 0
    %v958 = vsel %vm772, %v275, 0
    %960 = vmatprep.subr.bf16.mxu0 0
    %961 = vmatpush1.bf16.msra.mxu0 0
    %962 = vmatprep.subr.bf16.mxu0 0
    %963 = vmatpush1.bf16.msra.mxu0 0
    %964 = vmatprep.subr.bf16.mxu0 0
    %965 = vmatpush1.bf16.msra.mxu0 0
    %966 = vmatprep.subr.bf16.mxu0 0
    %967 = vmatpush1.bf16.msra.mxu0 0
    %968 = vmatprep.subr.bf16.mxu0 0
    %969 = vmatpush1.bf16.msra.mxu0 0
    %970 = vmatprep.subr.bf16.mxu0 0
    %971 = vmatpush1.bf16.msra.mxu0 0
    %972 = vmatprep.subr.bf16.mxu0 0
    %973 = vmatpush1.bf16.msra.mxu0 0
    %974 = vmatprep.subr.bf16.mxu0 0
    %975 = vmatpush1.bf16.msra.mxu0 %v958
    %976 = vmatprep.subr.bf16.mxu0 0
    %977 = vmatpush2.bf16.msra.mxu0 0
    %978 = vmatprep.subr.bf16.mxu0 0
    %979 = vmatpush2.bf16.msra.mxu0 0
    %980 = vmatprep.subr.bf16.mxu0 0
    %981 = vmatpush2.bf16.msra.mxu0 0
    %982 = vmatprep.subr.bf16.mxu0 0
    %983 = vmatpush2.bf16.msra.mxu0 0
    %984 = vmatprep.subr.bf16.mxu0 0
    %985 = vmatpush2.bf16.msra.mxu0 0
    %986 = vmatprep.subr.bf16.mxu0 0
    %987 = vmatpush2.bf16.msra.mxu0 0
    %988 = vmatprep.subr.bf16.mxu0 0
    %989 = vmatpush2.bf16.msra.mxu0 0
    %990 = vmatprep.subr.bf16.mxu0 0
    %991 = vmatpush2.bf16.msra.mxu0 0
    %992 = vmatprep.mubr.bf16.mxu0 0
    %993 = vmatmul.mubr.bf16.gmra.mxu0 %v955
    %v994 = vpop.f32.mrf.mxu0
    %v995 = vadd.f32 0.0, %v994
    %v996 = vpop.f32.mrf.mxu0
    %v997 = vpop.f32.mrf.mxu0
    %v998 = vpop.f32.mrf.mxu0
    %999 = vdwg.mxu0
    %v1001 = vsel %vm672, %v766, 0
    %v1004 = vsel %vm772, %v276, 0
    %1006 = vmatprep.subr.bf16.mxu0 0
    %1007 = vmatpush1.bf16.msra.mxu0 0
    %1008 = vmatprep.subr.bf16.mxu0 0
    %1009 = vmatpush1.bf16.msra.mxu0 0
    %1010 = vmatprep.subr.bf16.mxu0 0
    %1011 = vmatpush1.bf16.msra.mxu0 0
    %1012 = vmatprep.subr.bf16.mxu0 0
    %1013 = vmatpush1.bf16.msra.mxu0 0
    %1014 = vmatprep.subr.bf16.mxu0 0
    %1015 = vmatpush1.bf16.msra.mxu0 0
    %1016 = vmatprep.subr.bf16.mxu0 0
    %1017 = vmatpush1.bf16.msra.mxu0 0
    %1018 = vmatprep.subr.bf16.mxu0 0
    %1019 = vmatpush1.bf16.msra.mxu0 0
    %1020 = vmatprep.subr.bf16.mxu0 0
    %1021 = vmatpush1.bf16.msra.mxu0 %v1004
    %1022 = vmatprep.subr.bf16.mxu0 0
    %1023 = vmatpush2.bf16.msra.mxu0 0
    %1024 = vmatprep.subr.bf16.mxu0 0
    %1025 = vmatpush2.bf16.msra.mxu0 0
    %1026 = vmatprep.subr.bf16.mxu0 0
    %1027 = vmatpush2.bf16.msra.mxu0 0
    %1028 = vmatprep.subr.bf16.mxu0 0
    %1029 = vmatpush2.bf16.msra.mxu0 0
    %1030 = vmatprep.subr.bf16.mxu0 0
    %1031 = vmatpush2.bf16.msra.mxu0 0
    %1032 = vmatprep.subr.bf16.mxu0 0
    %1033 = vmatpush2.bf16.msra.mxu0 0
    %1034 = vmatprep.subr.bf16.mxu0 0
    %1035 = vmatpush2.bf16.msra.mxu0 0
    %1036 = vmatprep.subr.bf16.mxu0 0
    %1037 = vmatpush2.bf16.msra.mxu0 0
    %1038 = vmatprep.mubr.bf16.mxu0 0
    %1039 = vmatmul.mubr.bf16.gmra.mxu0 %v1001
    %v1040 = vpop.f32.mrf.mxu0
    %v1041 = vadd.f32 0.0, %v1040
    %v1042 = vpop.f32.mrf.mxu0
    %v1043 = vpop.f32.mrf.mxu0
    %v1044 = vpop.f32.mrf.mxu0
    %1045 = vdwg.mxu0
    %v1047 = vsel %vm672, %v767, 0
    %v1050 = vsel %vm772, %v277, 0
    %1052 = vmatprep.subr.bf16.mxu0 0
    %1053 = vmatpush1.bf16.msra.mxu0 0
    %1054 = vmatprep.subr.bf16.mxu0 0
    %1055 = vmatpush1.bf16.msra.mxu0 0
    %1056 = vmatprep.subr.bf16.mxu0 0
    %1057 = vmatpush1.bf16.msra.mxu0 0
    %1058 = vmatprep.subr.bf16.mxu0 0
    %1059 = vmatpush1.bf16.msra.mxu0 0
    %1060 = vmatprep.subr.bf16.mxu0 0
    %1061 = vmatpush1.bf16.msra.mxu0 0
    %1062 = vmatprep.subr.bf16.mxu0 0
    %1063 = vmatpush1.bf16.msra.mxu0 0
    %1064 = vmatprep.subr.bf16.mxu0 0
    %1065 = vmatpush1.bf16.msra.mxu0 0
    %1066 = vmatprep.subr.bf16.mxu0 0
    %1067 = vmatpush1.bf16.msra.mxu0 %v1050
    %1068 = vmatprep.subr.bf16.mxu0 0
    %1069 = vmatpush2.bf16.msra.mxu0 0
    %1070 = vmatprep.subr.bf16.mxu0 0
    %1071 = vmatpush2.bf16.msra.mxu0 0
    %1072 = vmatprep.subr.bf16.mxu0 0
    %1073 = vmatpush2.bf16.msra.mxu0 0
    %1074 = vmatprep.subr.bf16.mxu0 0
    %1075 = vmatpush2.bf16.msra.mxu0 0
    %1076 = vmatprep.subr.bf16.mxu0 0
    %1077 = vmatpush2.bf16.msra.mxu0 0
    %1078 = vmatprep.subr.bf16.mxu0 0
    %1079 = vmatpush2.bf16.msra.mxu0 0
    %1080 = vmatprep.subr.bf16.mxu0 0
    %1081 = vmatpush2.bf16.msra.mxu0 0
    %1082 = vmatprep.subr.bf16.mxu0 0
    %1083 = vmatpush2.bf16.msra.mxu0 0
    %1084 = vmatprep.mubr.bf16.mxu0 0
    %1085 = vmatmul.mubr.bf16.gmra.mxu0 %v1047
    %v1086 = vpop.f32.mrf.mxu0
    %v1087 = vadd.f32 0.0, %v1086
    %v1088 = vpop.f32.mrf.mxu0
    %v1089 = vpop.f32.mrf.mxu0
    %v1090 = vpop.f32.mrf.mxu0
    %1091 = vdwg.mxu0
    %v1093 = vsel %vm672, %v768, 0
    %v1096 = vsel %vm772, %v278, 0
    %1098 = vmatprep.subr.bf16.mxu0 0
    %1099 = vmatpush1.bf16.msra.mxu0 0
    %1100 = vmatprep.subr.bf16.mxu0 0
    %1101 = vmatpush1.bf16.msra.mxu0 0
    %1102 = vmatprep.subr.bf16.mxu0 0
    %1103 = vmatpush1.bf16.msra.mxu0 0
    %1104 = vmatprep.subr.bf16.mxu0 0
    %1105 = vmatpush1.bf16.msra.mxu0 0
    %1106 = vmatprep.subr.bf16.mxu0 0
    %1107 = vmatpush1.bf16.msra.mxu0 0
    %1108 = vmatprep.subr.bf16.mxu0 0
    %1109 = vmatpush1.bf16.msra.mxu0 0
    %1110 = vmatprep.subr.bf16.mxu0 0
    %1111 = vmatpush1.bf16.msra.mxu0 0
    %1112 = vmatprep.subr.bf16.mxu0 0
    %1113 = vmatpush1.bf16.msra.mxu0 %v1096
    %1114 = vmatprep.subr.bf16.mxu0 0
    %1115 = vmatpush2.bf16.msra.mxu0 0
    %1116 = vmatprep.subr.bf16.mxu0 0
    %1117 = vmatpush2.bf16.msra.mxu0 0
    %1118 = vmatprep.subr.bf16.mxu0 0
    %1119 = vmatpush2.bf16.msra.mxu0 0
    %1120 = vmatprep.subr.bf16.mxu0 0
    %1121 = vmatpush2.bf16.msra.mxu0 0
    %1122 = vmatprep.subr.bf16.mxu0 0
    %1123 = vmatpush2.bf16.msra.mxu0 0
    %1124 = vmatprep.subr.bf16.mxu0 0
    %1125 = vmatpush2.bf16.msra.mxu0 0
    %1126 = vmatprep.subr.bf16.mxu0 0
    %1127 = vmatpush2.bf16.msra.mxu0 0
    %1128 = vmatprep.subr.bf16.mxu0 0
    %1129 = vmatpush2.bf16.msra.mxu0 0
    %1130 = vmatprep.mubr.bf16.mxu0 0
    %1131 = vmatmul.mubr.bf16.gmra.mxu0 %v1093
    %v1132 = vpop.f32.mrf.mxu0
    %v1133 = vadd.f32 0.0, %v1132
    %v1134 = vpop.f32.mrf.mxu0
    %v1135 = vpop.f32.mrf.mxu0
    %v1136 = vpop.f32.mrf.mxu0
    %1137 = vdwg.mxu0
    %1140 = vrot.lane.b32.xlu0 %v903, 16
    %v1141 = vpop.permute.xlu0 %1140
    %1142 = vrot.lane.b32.xlu0 %v949, 16
    %v1143 = vpop.permute.xlu0 %1142
    %1148 = vrot.lane.b32.xlu0 %v995, 32
    %v1149 = vpop.permute.xlu0 %1148
    %1150 = vrot.lane.b32.xlu0 %v1041, 32
    %v1151 = vpop.permute.xlu0 %1150
    %1156 = vrot.lane.b32.xlu0 %v1087, 48
    %v1157 = vpop.permute.xlu0 %1156
    %1158 = vrot.lane.b32.xlu0 %v1133, 48
    %v1159 = vpop.permute.xlu0 %1158
    %v1162 = vsel %vm282, %v811, %v1141
    %v1163 = vsel %vm282, %v857, %v1143
    %vm1164 = vcmask 261120
    %v1165 = vsel %vm1164, %v1162, %v1149
    %v1166 = vsel %vm1164, %v1163, %v1151
    %vm1167 = vcmask 392192
    %v1168 = vsel %vm1167, %v1165, %v1157
    %v1169 = vsel %vm1167, %v1166, %v1159
    %v1170 = vpack.c.bf16 %v1169, %v1168
    %v1179 = vunpack.c.l.b16 %v35
    %v1180 = vunpack.c.l.b16 %v36
    %v1181 = vunpack.c.l.b16 %v37
    %v1182 = vunpack.c.l.b16 %v38
    %v1183 = vunpack.c.l.b16 %v39
    %v1184 = vunpack.c.l.b16 %v40
    %v1185 = vunpack.c.l.b16 %v41
    %v1186 = vunpack.c.l.b16 %v42
    %v1187 = vpack.c.b16 %v1180, %v1179
    %v1188 = vpack.c.b16 %v1182, %v1181
    %v1189 = vpack.c.b16 %v1184, %v1183
    %v1190 = vpack.c.b16 %v1186, %v1185
    %v1196 = vsel %vm93, %v1170, 0
    %1198 = vmatprep.subr.bf16.mxu0 0
    %1199 = vmatpush1.bf16.msra.mxu0 0
    %1200 = vmatprep.subr.bf16.mxu0 0
    %1201 = vmatpush1.bf16.msra.mxu0 0
    %1202 = vmatprep.subr.bf16.mxu0 0
    %1203 = vmatpush1.bf16.msra.mxu0 0
    %1204 = vmatprep.subr.bf16.mxu0 0
    %1205 = vmatpush1.bf16.msra.mxu0 0
    %1206 = vmatprep.subr.bf16.mxu0 0
    %1207 = vmatpush1.bf16.msra.mxu0 %v1190
    %1208 = vmatprep.subr.bf16.mxu0 0
    %1209 = vmatpush1.bf16.msra.mxu0 %v1189
    %1210 = vmatprep.subr.bf16.mxu0 0
    %1211 = vmatpush1.bf16.msra.mxu0 %v1188
    %1212 = vmatprep.subr.bf16.mxu0 0
    %1213 = vmatpush1.bf16.msra.mxu0 %v1187
    %1214 = vmatprep.subr.bf16.mxu0 0
    %1215 = vmatpush2.bf16.msra.mxu0 0
    %1216 = vmatprep.subr.bf16.mxu0 0
    %1217 = vmatpush2.bf16.msra.mxu0 0
    %1218 = vmatprep.subr.bf16.mxu0 0
    %1219 = vmatpush2.bf16.msra.mxu0 0
    %1220 = vmatprep.subr.bf16.mxu0 0
    %1221 = vmatpush2.bf16.msra.mxu0 0
    %1222 = vmatprep.subr.bf16.mxu0 0
    %1223 = vmatpush2.bf16.msra.mxu0 0
    %1224 = vmatprep.subr.bf16.mxu0 0
    %1225 = vmatpush2.bf16.msra.mxu0 0
    %1226 = vmatprep.subr.bf16.mxu0 0
    %1227 = vmatpush2.bf16.msra.mxu0 0
    %1228 = vmatprep.subr.bf16.mxu0 0
    %1229 = vmatpush2.bf16.msra.mxu0 0
    %1230 = vmatprep.mubr.bf16.mxu0 0
    %1231 = vmatmul.mubr.bf16.gmra.mxu0 %v1196
    %v1232 = vpop.f32.mrf.mxu0
    %v1233 = vadd.f32 %v89, %v1232
    %v1234 = vpop.f32.mrf.mxu0
    %v1235 = vpop.f32.mrf.mxu0
    %v1236 = vadd.f32 %v89, %v1235
    %v1237 = vpop.f32.mrf.mxu0
    %1238 = vdwg.mxu0
    %v1239 = vadd.f32 %v25, %v1233
    %v1240 = vadd.f32 %v26, %v1236
    %v1241 = vsel %vm93, %v1239, 0.0
    %1242 = vadd.xlane.f32.xlu0 %v1241
    %v1243 = vpop.xlane.xlu0 %1242
    %v1244 = vsel %vm93, %v1240, 0.0
    %1245 = vadd.xlane.f32.xlu0 %v1244
    %v1246 = vpop.xlane.xlu0 %1245
    %v1247 = vmul.f32 %v1243, %v100
    %v1248 = vmul.f32 %v1246, %v100
    %v1249 = vsub.f32 %v1239, %v1247
    %v1250 = vsub.f32 %v1240, %v1248
    %v1251 = vmul.f32 %v1249, %v1249
    %v1252 = vmul.f32 %v1250, %v1250
    %v1253 = vsel %vm93, %v1251, 0.0
    %1254 = vadd.xlane.f32.xlu0 %v1253
    %v1255 = vpop.xlane.xlu0 %1254
    %v1256 = vsel %vm93, %v1252, 0.0
    %1257 = vadd.xlane.f32.xlu0 %v1256
    %v1258 = vpop.xlane.xlu0 %1257
    %v1259 = vmul.f32 %v1255, %v100
    %v1260 = vmul.f32 %v1258, %v100
    %v1261 = vadd.f32 %v1259, 1e-05
    %v1262 = vadd.f32 %v1260, 1e-05
    %v1263 = vrsqrt.pop %v1261
    %v1264 = vrsqrt.pop %v1262
    %v1265 = vmul.f32 %v1249, %v1263
    %v1266 = vmul.f32 %v1250, %v1264
    %v1267 = vmul.f32 %v1265, %v85
    %v1268 = vmul.f32 %v1266, %v85
    %v1269 = vadd.f32 %v1267, %v86
    %v1270 = vadd.f32 %v1268, %v86
    %v1271 = vpack.c.bf16 %v1270, %v1269
    %v1273 = vlaneseq
    %v1274 = vshrl.u32 %v1273, 7
    %v1275 = vsub.s32 0, %v1274
    %v1276 = vrot.slane %v91, %v1275
    %v1277 = vlaneseq
    %v1278 = vshrl.u32 %v1277, 7
    %v1279 = vsub.s32 1, %v1278
    %v1280 = vrot.slane %v91, %v1279
    %v1291 = vunpack.c.l.b16 %v43
    %v1292 = vunpack.c.h.b16 %v43
    %v1293 = vunpack.c.l.b16 %v44
    %v1294 = vunpack.c.h.b16 %v44
    %v1295 = vunpack.c.l.b16 %v45
    %v1296 = vunpack.c.h.b16 %v45
    %v1297 = vunpack.c.l.b16 %v46
    %v1298 = vunpack.c.h.b16 %v46
    %v1299 = vunpack.c.l.b16 %v47
    %v1300 = vunpack.c.h.b16 %v47
    %v1301 = vunpack.c.l.b16 %v48
    %v1302 = vunpack.c.h.b16 %v48
    %v1303 = vunpack.c.l.b16 %v49
    %v1304 = vunpack.c.h.b16 %v49
    %v1305 = vunpack.c.l.b16 %v50
    %v1306 = vunpack.c.h.b16 %v50
    %v1307 = vpack.c.b16 %v1293, %v1291
    %v1308 = vpack.c.b16 %v1294, %v1292
    %v1309 = vpack.c.b16 %v1297, %v1295
    %v1310 = vpack.c.b16 %v1298, %v1296
    %v1311 = vpack.c.b16 %v1301, %v1299
    %v1312 = vpack.c.b16 %v1302, %v1300
    %v1313 = vpack.c.b16 %v1305, %v1303
    %v1314 = vpack.c.b16 %v1306, %v1304
    %v1324 = vsel %vm93, %v1271, 0
    %1326 = vmatprep.subr.bf16.mxu0 0
    %1327 = vmatpush1.bf16.msra.mxu0 0
    %1328 = vmatprep.subr.bf16.mxu0 0
    %1329 = vmatpush1.bf16.msra.mxu0 0
    %1330 = vmatprep.subr.bf16.mxu0 0
    %1331 = vmatpush1.bf16.msra.mxu0 0
    %1332 = vmatprep.subr.bf16.mxu0 0
    %1333 = vmatpush1.bf16.msra.mxu0 0
    %1334 = vmatprep.subr.bf16.mxu0 %v1314
    %1335 = vmatpush1.bf16.msra.mxu0 %v1313
    %1336 = vmatprep.subr.bf16.mxu0 %v1312
    %1337 = vmatpush1.bf16.msra.mxu0 %v1311
    %1338 = vmatprep.subr.bf16.mxu0 %v1310
    %1339 = vmatpush1.bf16.msra.mxu0 %v1309
    %1340 = vmatprep.subr.bf16.mxu0 %v1308
    %1341 = vmatpush1.bf16.msra.mxu0 %v1307
    %1342 = vmatprep.subr.bf16.mxu0 0
    %1343 = vmatpush2.bf16.msra.mxu0 0
    %1344 = vmatprep.subr.bf16.mxu0 0
    %1345 = vmatpush2.bf16.msra.mxu0 0
    %1346 = vmatprep.subr.bf16.mxu0 0
    %1347 = vmatpush2.bf16.msra.mxu0 0
    %1348 = vmatprep.subr.bf16.mxu0 0
    %1349 = vmatpush2.bf16.msra.mxu0 0
    %1350 = vmatprep.subr.bf16.mxu0 0
    %1351 = vmatpush2.bf16.msra.mxu0 0
    %1352 = vmatprep.subr.bf16.mxu0 0
    %1353 = vmatpush2.bf16.msra.mxu0 0
    %1354 = vmatprep.subr.bf16.mxu0 0
    %1355 = vmatpush2.bf16.msra.mxu0 0
    %1356 = vmatprep.subr.bf16.mxu0 0
    %1357 = vmatpush2.bf16.msra.mxu0 0
    %1358 = vmatprep.mubr.bf16.mxu0 0
    %1359 = vmatmul.mubr.bf16.gmra.mxu0 %v1324
    %v1360 = vpop.f32.mrf.mxu0
    %v1361 = vadd.f32 %v1276, %v1360
    %v1362 = vpop.f32.mrf.mxu0
    %v1363 = vadd.f32 %v1280, %v1362
    %v1364 = vpop.f32.mrf.mxu0
    %v1365 = vadd.f32 %v1276, %v1364
    %v1366 = vpop.f32.mrf.mxu0
    %v1367 = vadd.f32 %v1280, %v1366
    %1368 = vdwg.mxu0
    %v1369 = vmul.f32 %v1361, 0.5
    %v1370 = vmul.f32 %v1363, 0.5
    %v1371 = vmul.f32 %v1365, 0.5
    %v1372 = vmul.f32 %v1367, 0.5
    %v1373 = vmul.f32 %v1361, 0.70710677
    %v1374 = vmul.f32 %v1363, 0.70710677
    %v1375 = vmul.f32 %v1365, 0.70710677
    %v1376 = vmul.f32 %v1367, 0.70710677
    %v1377 = verf.f32.pop %v1373
    %v1378 = verf.f32.pop %v1374
    %v1379 = verf.f32.pop %v1375
    %v1380 = verf.f32.pop %v1376
    %v1381 = vadd.f32 %v1377, 1.0
    %v1382 = vadd.f32 %v1378, 1.0
    %v1383 = vadd.f32 %v1379, 1.0
    %v1384 = vadd.f32 %v1380, 1.0
    %v1385 = vmul.f32 %v1369, %v1381
    %v1386 = vmul.f32 %v1370, %v1382
    %v1387 = vmul.f32 %v1371, %v1383
    %v1388 = vmul.f32 %v1372, %v1384
    %v1389 = vpack.c.bf16 %v1387, %v1385
    %v1390 = vpack.c.bf16 %v1388, %v1386
    %v1423 = vunpack.c.l.b16 %v51
    %v1424 = vunpack.c.l.b16 %v52
    %v1425 = vunpack.c.l.b16 %v53
    %v1426 = vunpack.c.l.b16 %v54
    %v1427 = vunpack.c.l.b16 %v55
    %v1428 = vunpack.c.l.b16 %v56
    %v1429 = vunpack.c.l.b16 %v57
    %v1430 = vunpack.c.l.b16 %v58
    %v1431 = vunpack.c.l.b16 %v59
    %v1432 = vunpack.c.l.b16 %v60
    %v1433 = vunpack.c.l.b16 %v61
    %v1434 = vunpack.c.l.b16 %v62
    %v1435 = vunpack.c.l.b16 %v63
    %v1436 = vunpack.c.l.b16 %v64
    %v1437 = vunpack.c.l.b16 %v65
    %v1438 = vunpack.c.l.b16 %v66
    %v1439 = vunpack.c.l.b16 %v67
    %v1440 = vunpack.c.l.b16 %v68
    %v1441 = vunpack.c.l.b16 %v69
    %v1442 = vunpack.c.l.b16 %v70
    %v1443 = vunpack.c.l.b16 %v71
    %v1444 = vunpack.c.l.b16 %v72
    %v1445 = vunpack.c.l.b16 %v73
    %v1446 = vunpack.c.l.b16 %v74
    %v1447 = vunpack.c.l.b16 %v75
    %v1448 = vunpack.c.l.b16 %v76
    %v1449 = vunpack.c.l.b16 %v77
    %v1450 = vunpack.c.l.b16 %v78
    %v1451 = vunpack.c.l.b16 %v79
    %v1452 = vunpack.c.l.b16 %v80
    %v1453 = vunpack.c.l.b16 %v81
    %v1454 = vunpack.c.l.b16 %v82
    %v1455 = vpack.c.b16 %v1424, %v1423
    %v1456 = vpack.c.b16 %v1426, %v1425
    %v1457 = vpack.c.b16 %v1428, %v1427
    %v1458 = vpack.c.b16 %v1430, %v1429
    %v1459 = vpack.c.b16 %v1432, %v1431
    %v1460 = vpack.c.b16 %v1434, %v1433
    %v1461 = vpack.c.b16 %v1436, %v1435
    %v1462 = vpack.c.b16 %v1438, %v1437
    %v1463 = vpack.c.b16 %v1440, %v1439
    %v1464 = vpack.c.b16 %v1442, %v1441
    %v1465 = vpack.c.b16 %v1444, %v1443
    %v1466 = vpack.c.b16 %v1446, %v1445
    %v1467 = vpack.c.b16 %v1448, %v1447
    %v1468 = vpack.c.b16 %v1450, %v1449
    %v1469 = vpack.c.b16 %v1452, %v1451
    %v1470 = vpack.c.b16 %v1454, %v1453
    %1487 = vmatprep.subr.bf16.mxu0 0
    %1488 = vmatpush1.bf16.msra.mxu0 %v1462
    %1489 = vmatprep.subr.bf16.mxu0 0
    %1490 = vmatpush1.bf16.msra.mxu0 %v1461
    %1491 = vmatprep.subr.bf16.mxu0 0
    %1492 = vmatpush1.bf16.msra.mxu0 %v1460
    %1493 = vmatprep.subr.bf16.mxu0 0
    %1494 = vmatpush1.bf16.msra.mxu0 %v1459
    %1495 = vmatprep.subr.bf16.mxu0 0
    %1496 = vmatpush1.bf16.msra.mxu0 %v1458
    %1497 = vmatprep.subr.bf16.mxu0 0
    %1498 = vmatpush1.bf16.msra.mxu0 %v1457
    %1499 = vmatprep.subr.bf16.mxu0 0
    %1500 = vmatpush1.bf16.msra.mxu0 %v1456
    %1501 = vmatprep.subr.bf16.mxu0 0
    %1502 = vmatpush1.bf16.msra.mxu0 %v1455
    %1503 = vmatprep.subr.bf16.mxu0 0
    %1504 = vmatpush2.bf16.msra.mxu0 %v1470
    %1505 = vmatprep.subr.bf16.mxu0 0
    %1506 = vmatpush2.bf16.msra.mxu0 %v1469
    %1507 = vmatprep.subr.bf16.mxu0 0
    %1508 = vmatpush2.bf16.msra.mxu0 %v1468
    %1509 = vmatprep.subr.bf16.mxu0 0
    %1510 = vmatpush2.bf16.msra.mxu0 %v1467
    %1511 = vmatprep.subr.bf16.mxu0 0
    %1512 = vmatpush2.bf16.msra.mxu0 %v1466
    %1513 = vmatprep.subr.bf16.mxu0 0
    %1514 = vmatpush2.bf16.msra.mxu0 %v1465
    %1515 = vmatprep.subr.bf16.mxu0 0
    %1516 = vmatpush2.bf16.msra.mxu0 %v1464
    %1517 = vmatprep.subr.bf16.mxu0 0
    %1518 = vmatpush2.bf16.msra.mxu0 %v1463
    %1519 = vmatprep.mubr.bf16.mxu0 %v1390
    %1520 = vmatmul.mubr.bf16.gmra.mxu0 %v1389
    %v1521 = vpop.f32.mrf.mxu0
    %v1522 = vadd.f32 0.0, %v1521
    %v1523 = vpop.f32.mrf.mxu0
    %v1524 = vpop.f32.mrf.mxu0
    %v1525 = vadd.f32 0.0, %v1524
    %v1526 = vpop.f32.mrf.mxu0
    %1527 = vdwg.mxu0
    %v1528 = vadd.f32 %v1239, %v1522
    %v1529 = vadd.f32 %v1240, %v1525
    %v1530 = vadd.f32 %v1528, %v92
    %v1531 = vadd.f32 %v1529, %v92
    %1533 = vrot.lane.b32.xlu0 %v1531, 64
    %v1534 = vpop.permute.xlu0 %1533
    %v1536 = vsel %vm93, %v1530, %v1534
    %1537 = vst [vmem:[#allocation2] sm:$0xff] %v1536
    // Predicated region
    $region26: #{tpu_custom_call.1} parent=1 // pred_check
      _
    $region27: #{tpu_custom_call.1} parent=1 // pred_check_branch
      %1539 = sbr.rel (0) target = $region29
    $region28: #{tpu_custom_call.1} parent=1 // pred_region
      %s1541 = ssub.s32 128, 128
      %1542 = vsyncadd [#allocation3], %s1541
      %s1544 = sshll.u32 [#allocation2], 4
      %s1545 = int_to_ptr.vmem [resolvable:$true] %s1544
      %1547 = dma.vmem_to_hbm [thread:$0]  %s1545, 128, %s6, [#allocation3]
    $region29: #{tpu_custom_call.1} parent=1 // pred_fallthru
      _
    // Predicated region
    $region30: #{tpu_custom_call.1} parent=1 // pred_check
      _
    $region31: #{tpu_custom_call.1} parent=1 // pred_check_branch
      %1549 = sbr.rel (0) target = $region33
    $region32: #{tpu_custom_call.1} parent=1 // pred_region
      %1550 = dma.done [#allocation3], 128
    $region33: #{tpu_custom_call.1} parent=1 // pred_fallthru
      _
    %1551 = vsyncpa [#allocation3], 1

</llo_original>
